<compile_context>
chip_gen: v7x
topology: tpu7x:2x2x1
jax: 0.10.0
libtpu: 0.0.40
codegen_flags: <defaults>
</compile_context>

<pallas_src>
import functools
import math

import jax
import jax.numpy as jnp
from jax.experimental import pallas as pl
from jax.experimental.pallas import tpu as pltpu


# ---------------------------------------------------------------------------
# Kernels
# ---------------------------------------------------------------------------

def _gcn_pass1_kernel(a_ref, xs_ref, d_ref, w1_ref, b1_ref, w2_ref,
                      o_ref, acc_ref):
    """out[i] = d_i * ( relu( d_i * ((sum_k A_hat[i,k] @ xs[k]) @ W1) + b1 ) @ W2 ).

    xs = d * x is the column-scaled node-feature matrix, A_hat is the raw
    (A + I) structure matrix (int8 or compute dtype), d = deg^-1/2.
    """
    k = pl.program_id(1)

    @pl.when(k == 0)
    def _():
        acc_ref[...] = jnp.zeros_like(acc_ref)

    # Single MXU op per grid step; int8 A_hat upcast to compute dtype on VPU.
    acc_ref[...] += jnp.dot(a_ref[...].astype(xs_ref.dtype), xs_ref[...],
                            preferred_element_type=jnp.float32)

    @pl.when(k == pl.num_programs(1) - 1)
    def _():
        d = d_ref[...]                                     # (tile_i, 1) f32
        z = jnp.dot(acc_ref[...].astype(w1_ref.dtype), w1_ref[...],
                    preferred_element_type=jnp.float32)
        h1 = jnp.maximum(d * z + b1_ref[...], 0.0)         # GCNConv1 + ReLU
        # Fused h1 @ W2, pre-scaled by d so pass 2's K stream is ready to use.
        o_ref[...] = (d * jnp.dot(h1.astype(w2_ref.dtype), w2_ref[...],
                                  preferred_element_type=jnp.float32)
                      ).astype(o_ref.dtype)


def _gcn_pass2_kernel(a_ref, hw_ref, d_ref, b2_ref, wp_ref, bp_ref,
                      o_ref, acc_ref):
    """y[i] = ( d_i * (sum_k A_hat[i,k] @ hw[k]) + b2 ) @ Wp + bp."""
    k = pl.program_id(1)

    @pl.when(k == 0)
    def _():
        acc_ref[...] = jnp.zeros_like(acc_ref)

    acc_ref[...] += jnp.dot(a_ref[...].astype(hw_ref.dtype), hw_ref[...],
                            preferred_element_type=jnp.float32)

    @pl.when(k == pl.num_programs(1) - 1)
    def _():
        h2 = d_ref[...] * acc_ref[...] + b2_ref[...]       # GCNConv2
        o_ref[...] = (jnp.dot(h2.astype(wp_ref.dtype), wp_ref[...],
                              preferred_element_type=jnp.float32)
                      + bp_ref[...]).astype(o_ref.dtype)   # proj head


# ---------------------------------------------------------------------------
# Wrapper
# ---------------------------------------------------------------------------

def _round_up(v, m):
    return ((v + m - 1) // m) * m


def _pad2(x, rows, cols):
    return jnp.pad(x, ((0, rows - x.shape[0]), (0, cols - x.shape[1])))


def gcn_structure(edge_index, num_nodes, edge_weight=None):
    """(A + I) structure matrix and deg^-1/2, exactly as PyG's gcn_norm.

    Unweighted graphs return an int8 (A + I) so the kernels stream 1 byte per
    adjacency element; weighted graphs fall back to float32 values.
    """
    src, dst = edge_index[0], edge_index[1]
    if edge_weight is None:
        edge_weight = jnp.ones(src.shape, dtype=jnp.float32)
        out_dtype = jnp.int8
    else:
        out_dtype = jnp.float32
    a_hat = jnp.zeros((num_nodes, num_nodes), jnp.float32)
    a_hat = a_hat.at[dst, src].add(edge_weight)
    a_hat = a_hat + jnp.eye(num_nodes, dtype=jnp.float32)
    deg = a_hat.sum(axis=1)
    deg_inv_sqrt = jnp.where(deg > 0, 1.0 / jnp.sqrt(deg), 0.0)
    return a_hat.astype(out_dtype), deg_inv_sqrt


def _pick_tiles(n, tile_rows, tile_cols):
    """Decoupled row / K tiles with minimal zero padding of the node axis."""
    n128 = _round_up(n, 128)
    tile_rows = min(tile_rows, n128)
    tile_cols = min(tile_cols, n128)
    # Prefer tiles that divide the 128-aligned node count (no padding beyond
    # 128 alignment streamed in the N^2 A passes); fall back to rounding n up
    # to the requested tiles when the divisors are too small — big tiles beat
    # the (int8, ~1%) padding waste for the bandwidth-bound A stream.
    divs = [t for t in range(128, n128 + 1, 128) if n128 % t == 0]
    ti = max((t for t in divs if t <= tile_rows), default=0)
    tk = max((t for t in divs if t <= tile_cols), default=0)
    if ti >= min(256, tile_rows) and tk >= min(256, tile_cols):
        n_pad = n128
    else:
        ti, tk = tile_rows, tile_cols
        n_pad = _round_up(n, math.lcm(ti, tk))
    # v7x: keep >= 2 row tiles when possible so the "parallel" row axis can be
    # sharded across both TensorCores (v5e/v6e unaffected).
    if n_pad // ti < 2:
        cand = [t for t in range(128, n_pad // 2 + 1, 128) if n_pad % t == 0]
        if cand:
            ti = cand[-1]
    return ti, tk, n_pad


def gcl_forward(x, edge_index, w1, b1, w2, b2, wp, bp, *, edge_weight=None,
                compute_dtype=jnp.bfloat16, tile_rows=512, tile_cols=512):
    """GCL forward. Weights stored already transposed ([in, out]), biases 1-D."""
    assert tile_rows % 128 == 0 and tile_cols % 128 == 0
    n, in_dim = x.shape
    hid_dim = w1.shape[1]
    out_dim = w2.shape[1]
    proj_dim = wp.shape[1]

    cd = compute_dtype
    f32 = jnp.float32

    tile_i, tile_k, n_pad = _pick_tiles(n, tile_rows, tile_cols)
    in_p = _round_up(in_dim, 128)
    hid_p = _round_up(hid_dim, 128)
    out_p = _round_up(out_dim, 128)
    proj_p = _round_up(proj_dim, 128)

    # (A + I) structure + rank-1 normalization terms; A_norm is never built.
    a_hat, dis = gcn_structure(edge_index, n, edge_weight)
    a_p = _pad2(a_hat if a_hat.dtype == jnp.int8 else a_hat.astype(cd),
                n_pad, n_pad)
    d_p = _pad2(dis.reshape(-1, 1), n_pad, 1).astype(f32)      # row scaling
    xs_p = _pad2(dis[:, None] * x, n_pad, in_p).astype(cd)     # col scaling folded

    w1_p = _pad2(w1, in_p, hid_p).astype(cd)
    b1_p = _pad2(b1.reshape(1, -1), 1, hid_p).astype(f32)
    w2_p = _pad2(w2, hid_p, out_p).astype(cd)
    b2_p = _pad2(b2.reshape(1, -1), 1, out_p).astype(f32)
    wp_p = _pad2(wp, out_p, proj_p).astype(cd)
    bp_p = _pad2(bp.reshape(1, -1), 1, proj_p).astype(f32)

    grid = (n_pad // tile_i, n_pad // tile_k)
    cparams = pltpu.CompilerParams(
        dimension_semantics=("parallel", "arbitrary"))

    # -------- pass 1: h1w2 = d * ( relu(d*((A_hat @ (d*x)) @ W1) + b1) @ W2 )
    h1w2 = pl.pallas_call(
        _gcn_pass1_kernel,
        out_shape=jax.ShapeDtypeStruct((n_pad, out_p), cd),
        grid_spec=pltpu.PrefetchScalarGridSpec(
            num_scalar_prefetch=0,
            grid=grid,
            in_specs=[
                pl.BlockSpec((tile_i, tile_k), lambda i, k: (i, k)),    # A_hat
                pl.BlockSpec((tile_k, in_p), lambda i, k: (k, 0)),      # d * x
                pl.BlockSpec((tile_i, 1), lambda i, k: (i, 0)),         # d
                pl.BlockSpec((in_p, hid_p), lambda i, k: (0, 0)),       # W1
                pl.BlockSpec((1, hid_p), lambda i, k: (0, 0)),          # b1
                pl.BlockSpec((hid_p, out_p), lambda i, k: (0, 0)),      # W2
            ],
            out_specs=pl.BlockSpec((tile_i, out_p), lambda i, k: (i, 0)),
            scratch_shapes=[pltpu.VMEM((tile_i, in_p), jnp.float32)],
        ),
        compiler_params=cparams,
    )(a_p, xs_p, d_p, w1_p, b1_p, w2_p)

    # -------- pass 2: y = (d * (A_hat @ h1w2) + b2) @ Wp + bp ---------------
    y_pad = pl.pallas_call(
        _gcn_pass2_kernel,
        out_shape=jax.ShapeDtypeStruct((n_pad, proj_p), jnp.float32),
        grid_spec=pltpu.PrefetchScalarGridSpec(
            num_scalar_prefetch=0,
            grid=grid,
            in_specs=[
                pl.BlockSpec((tile_i, tile_k), lambda i, k: (i, k)),    # A_hat
                pl.BlockSpec((tile_k, out_p), lambda i, k: (k, 0)),     # h1w2
                pl.BlockSpec((tile_i, 1), lambda i, k: (i, 0)),         # d
                pl.BlockSpec((1, out_p), lambda i, k: (0, 0)),          # b2
                pl.BlockSpec((out_p, proj_p), lambda i, k: (0, 0)),     # Wp
                pl.BlockSpec((1, proj_p), lambda i, k: (0, 0)),         # bp
            ],
            out_specs=pl.BlockSpec((tile_i, proj_p), lambda i, k: (i, 0)),
            scratch_shapes=[pltpu.VMEM((tile_i, out_p), jnp.float32)],
        ),
        compiler_params=cparams,
    )(a_p, h1w2, d_p, b2_p, wp_p, bp_p)

    return y_pad[:n, :proj_dim]


# ---------------------------------------------------------------------------
# References (pure JAX)
# ---------------------------------------------------------------------------

def gcn_normalized_adjacency(edge_index, num_nodes, edge_weight=None):
    """Dense D^-1/2 (A + I) D^-1/2 (reference only)."""
    a_hat, dis = gcn_structure(edge_index, num_nodes, edge_weight)
    return dis[:, None] * a_hat.astype(jnp.float32) * dis[None, :]


def gcl_reference_f32(x, edge_index, w1, b1, w2, b2, wp, bp):
    """Straightforward f32 reference of the PyTorch module (eval mode)."""
    a = gcn_normalized_adjacency(edge_index, x.shape[0])
    h1 = jax.nn.relu(a @ (x @ w1) + b1[None, :])
    h2 = a @ (h1 @ w2) + b2[None, :]
    return h2 @ wp + bp[None, :]


def gcl_reference_mirror(x, edge_index, w1, b1, w2, b2, wp, bp, compute_dtype):
    """Reference mirroring the kernel's dtype pipeline / reassociation."""
    cd = compute_dtype
    f32 = jnp.float32
    a_hat, dis = gcn_structure(edge_index, x.shape[0])
    a_c = a_hat.astype(cd)
    d = dis[:, None]
    xs = (d * x).astype(cd)
    ax = jnp.dot(a_c, xs, preferred_element_type=f32)
    h1 = jnp.maximum(
        d * jnp.dot(ax.astype(cd), w1.astype(cd), preferred_element_type=f32)
        + b1[None, :], 0.0)
    hw = (d * jnp.dot(h1.astype(cd), w2.astype(cd),
                      preferred_element_type=f32)).astype(cd)
    h2 = d * jnp.dot(a_c, hw, preferred_element_type=f32) + b2[None, :]
    return (jnp.dot(h2.astype(cd), wp.astype(cd), preferred_element_type=f32)
            + bp[None, :])


# ---------------------------------------------------------------------------
# Demo / self-test
# ---------------------------------------------------------------------------

if __name__ == "__main__":
    # Small shapes consistent with GCL(in_dim, hid, out); num_nodes is NOT a
    # multiple of 128 so the padding path is exercised.
    num_nodes = 200
    in_dim, hid_dim, out_dim = 48, 16, 8

    key = jax.random.PRNGKey(0)
    k_x, k_w1, k_b1, k_w2, k_b2, k_wp, k_bp = jax.random.split(key, 7)

    x = jax.random.normal(k_x, (num_nodes, in_dim), dtype=jnp.float32)

    # Deterministic symmetric ring graph plus 7-hop chords (both directions).
    idx = jnp.arange(num_nodes, dtype=jnp.int32)
    nxt = jnp.roll(idx, -1)
    hop = jnp.roll(idx, -7)
    src = jnp.concatenate([idx, nxt, idx, hop])
    dst = jnp.concatenate([nxt, idx, hop, idx])
    edge_index = jnp.stack([src, dst])                     # [2, 4*num_nodes]

    # Deterministic parameters (stored already transposed for x @ W).
    w1 = jax.random.normal(k_w1, (in_dim, hid_dim), jnp.float32) * 0.1
    b1 = jax.random.normal(k_b1, (hid_dim,), jnp.float32) * 0.1
    w2 = jax.random.normal(k_w2, (hid_dim, out_dim), jnp.float32) * 0.1
    b2 = jax.random.normal(k_b2, (out_dim,), jnp.float32) * 0.1
    wp = jax.random.normal(k_wp, (out_dim, out_dim), jnp.float32) * 0.1
    bp = jax.random.normal(k_bp, (out_dim,), jnp.float32) * 0.1

    # f32 path with small tiles -> (2, 2) grid: validates padding, the K-axis
    # init/accumulate/finalize and the in-kernel rank-1 normalization against
    # the plain (dense A_norm) reference.
    fwd_f32 = jax.jit(functools.partial(
        gcl_forward, compute_dtype=jnp.float32, tile_rows=128, tile_cols=128))
    out_f32 = jax.block_until_ready(
        fwd_f32(x, edge_index, w1, b1, w2, b2, wp, bp))
    ref_f32 = gcl_reference_f32(x, edge_index, w1, b1, w2, b2, wp, bp)
    assert out_f32.shape == (num_nodes, out_dim)
    assert jnp.allclose(out_f32, ref_f32, atol=5e-3, rtol=5e-3), (
        float(jnp.max(jnp.abs(out_f32 - ref_f32))))

    # bf16 path with default (large, decoupled) tiles: int8 adjacency stream,
    # bf16 feature stream, f32 accumulation.
    fwd_bf16 = jax.jit(functools.partial(gcl_forward,
                                         compute_dtype=jnp.bfloat16))
    out_bf16 = jax.block_until_ready(
        fwd_bf16(x, edge_index, w1, b1, w2, b2, wp, bp))
    ref_bf16 = gcl_reference_mirror(x, edge_index, w1, b1, w2, b2, wp, bp,
                                    jnp.bfloat16)
    assert out_bf16.shape == (num_nodes, out_dim)
    assert jnp.allclose(out_bf16, ref_bf16, atol=3e-2, rtol=3e-2), (
        float(jnp.max(jnp.abs(out_bf16 - ref_bf16))))

    print("KERNEL_OK")
</pallas_src>

<mosaic_0001>
module attributes {stable_mosaic.version = 11 : i64} {
  func.func private @main(%arg0: i32) attributes {dimension_semantics = [#tpu.dimension_semantics<core_parallel>], iteration_bounds = array<i64: 2>, tpu.core_type = #tpu.core_type<sc_scalar_subcore>, window_params = []} {
    return
  }
}

module attributes {stable_mosaic.version = 11 : i64} {
  func.func private @main(%arg0: i32) attributes {dimension_semantics = [#tpu.dimension_semantics<core_parallel>], iteration_bounds = array<i64: 2>, tpu.core_type = #tpu.core_type<sc_scalar_subcore>, window_params = []} {
    return
  }
}

module attributes {stable_mosaic.version = 11 : i64} {
  func.func @_gcn_pass1_kernel(%arg0: i32, %arg1: i32, %arg2: memref<128x128xi8, #tpu.memory_space<vmem>>, %arg3: memref<128x128xf32, #tpu.memory_space<vmem>>, %arg4: memref<128x1xf32, #tpu.memory_space<vmem>>, %arg5: memref<128x128xf32, #tpu.memory_space<vmem>>, %arg6: memref<1x128xf32, #tpu.memory_space<vmem>>, %arg7: memref<128x128xf32, #tpu.memory_space<vmem>>, %arg8: memref<128x128xf32, #tpu.memory_space<vmem>>, %arg9: memref<128x128xf32, #tpu.memory_space<vmem>>) attributes {dimension_semantics = [#tpu.dimension_semantics<parallel>, #tpu.dimension_semantics<arbitrary>], iteration_bounds = array<i64: 2, 2>, scalar_prefetch = 0 : i64, scratch_operands = 1 : i64, tpu.core_type = #tpu.core_type<tc>, window_params = [{transform_indices = @transform_0, window_bounds = array<i64: 128, 128>}, {transform_indices = @transform_1, window_bounds = array<i64: 128, 128>}, {transform_indices = @transform_2, window_bounds = array<i64: 128, 1>}, {pipeline_mode = #tpu.pipeline_mode<synchronous>, transform_indices = @transform_3, window_bounds = array<i64: 128, 128>}, {pipeline_mode = #tpu.pipeline_mode<synchronous>, transform_indices = @transform_4, window_bounds = array<i64: 1, 128>}, {pipeline_mode = #tpu.pipeline_mode<synchronous>, transform_indices = @transform_5, window_bounds = array<i64: 128, 128>}, {transform_indices = @transform_6, window_bounds = array<i64: 128, 128>}]} {
    %c0_i32 = arith.constant 0 : i32
    %0 = arith.cmpi eq, %arg1, %c0_i32 : i32
    %1 = arith.extui %0 : i1 to i32
    %c0_i32_0 = arith.constant 0 : i32
    %2 = arith.cmpi ne, %1, %c0_i32_0 : i32
    scf.if %2 {
      %cst_9 = arith.constant 0.000000e+00 : f32
      %13 = vector.broadcast %cst_9 : f32 to vector<128x128xf32>
      %c0_10 = arith.constant 0 : index
      %c0_11 = arith.constant 0 : index
      %14 = vector.load %arg9[%c0_10, %c0_11] : memref<128x128xf32, #tpu.memory_space<vmem>>, vector<128x128xf32>
      tpu.vector_store %arg9[%c0_10, %c0_11], %13 {strides = array<i32>} : memref<128x128xf32, #tpu.memory_space<vmem>>, vector<128x128xf32>,
    } else {
    }
    %c0 = arith.constant 0 : index
    %c0_1 = arith.constant 0 : index
    %3 = vector.load %arg9[%c0, %c0_1] : memref<128x128xf32, #tpu.memory_space<vmem>>, vector<128x128xf32>
    %c0_2 = arith.constant 0 : index
    %c0_3 = arith.constant 0 : index
    %4 = vector.load %arg2[%c0_2, %c0_3] : memref<128x128xi8, #tpu.memory_space<vmem>>, vector<128x128xi8>
    %5 = arith.sitofp %4 : vector<128x128xi8> to vector<128x128xf32>
    %c0_4 = arith.constant 0 : index
    %c0_5 = arith.constant 0 : index
    %6 = vector.load %arg3[%c0_4, %c0_5] : memref<128x128xf32, #tpu.memory_space<vmem>>, vector<128x128xf32>
    %cst = arith.constant dense<0.000000e+00> : vector<128x128xf32>
    %7 = tpu.matmul %5, %6, %cst {dimension_numbers = #tpu.dot_dimension_numbers<[1], [0], [0], [1], [0, 0, 1, 1], [], []>} : vector<128x128xf32>, vector<128x128xf32>, vector<128x128xf32> -> vector<128x128xf32>
    %8 = arith.addf %3, %7 : vector<128x128xf32>
    %c0_6 = arith.constant 0 : index
    %c0_7 = arith.constant 0 : index
    %9 = vector.load %arg9[%c0_6, %c0_7] : memref<128x128xf32, #tpu.memory_space<vmem>>, vector<128x128xf32>
    tpu.vector_store %arg9[%c0_6, %c0_7], %8 {strides = array<i32>} : memref<128x128xf32, #tpu.memory_space<vmem>>, vector<128x128xf32>,
    %c1_i32 = arith.constant 1 : i32
    %10 = arith.cmpi eq, %arg1, %c1_i32 : i32
    %11 = arith.extui %10 : i1 to i32
    %c0_i32_8 = arith.constant 0 : i32
    %12 = arith.cmpi ne, %11, %c0_i32_8 : i32
    scf.if %12 {
      %c0_9 = arith.constant 0 : index
      %c0_10 = arith.constant 0 : index
      %13 = vector.load %arg4[%c0_9, %c0_10] : memref<128x1xf32, #tpu.memory_space<vmem>>, vector<128x1xf32>
      %c0_11 = arith.constant 0 : index
      %c0_12 = arith.constant 0 : index
      %14 = vector.load %arg9[%c0_11, %c0_12] : memref<128x128xf32, #tpu.memory_space<vmem>>, vector<128x128xf32>
      %c0_13 = arith.constant 0 : index
      %c0_14 = arith.constant 0 : index
      %15 = vector.load %arg5[%c0_13, %c0_14] : memref<128x128xf32, #tpu.memory_space<vmem>>, vector<128x128xf32>
      %cst_15 = arith.constant dense<0.000000e+00> : vector<128x128xf32>
      %16 = tpu.matmul %14, %15, %cst_15 {dimension_numbers = #tpu.dot_dimension_numbers<[1], [0], [0], [1], [0, 0, 1, 1], [], []>} : vector<128x128xf32>, vector<128x128xf32>, vector<128x128xf32> -> vector<128x128xf32>
      %17 = vector.broadcast %13 : vector<128x1xf32> to vector<128x128xf32>
      %18 = arith.mulf %17, %16 : vector<128x128xf32>
      %c0_16 = arith.constant 0 : index
      %c0_17 = arith.constant 0 : index
      %19 = vector.load %arg6[%c0_16, %c0_17] : memref<1x128xf32, #tpu.memory_space<vmem>>, vector<1x128xf32>
      %20 = vector.broadcast %19 : vector<1x128xf32> to vector<128x128xf32>
      %21 = arith.addf %18, %20 : vector<128x128xf32>
      %cst_18 = arith.constant 0.000000e+00 : f32
      %22 = vector.broadcast %cst_18 : f32 to vector<128x128xf32>
      %23 = arith.maximumf %21, %22 : vector<128x128xf32>
      %c0_19 = arith.constant 0 : index
      %c0_20 = arith.constant 0 : index
      %24 = vector.load %arg7[%c0_19, %c0_20] : memref<128x128xf32, #tpu.memory_space<vmem>>, vector<128x128xf32>
      %cst_21 = arith.constant dense<0.000000e+00> : vector<128x128xf32>
      %25 = tpu.matmul %23, %24, %cst_21 {dimension_numbers = #tpu.dot_dimension_numbers<[1], [0], [0], [1], [0, 0, 1, 1], [], []>} : vector<128x128xf32>, vector<128x128xf32>, vector<128x128xf32> -> vector<128x128xf32>
      %26 = vector.broadcast %13 : vector<128x1xf32> to vector<128x128xf32>
      %27 = arith.mulf %26, %25 : vector<128x128xf32>
      %c0_22 = arith.constant 0 : index
      %c0_23 = arith.constant 0 : index
      %28 = vector.load %arg8[%c0_22, %c0_23] : memref<128x128xf32, #tpu.memory_space<vmem>>, vector<128x128xf32>
      tpu.vector_store %arg8[%c0_22, %c0_23], %27 {strides = array<i32>} : memref<128x128xf32, #tpu.memory_space<vmem>>, vector<128x128xf32>,
    } else {
    }
    return
  }
  func.func @transform_0(%arg0: i32, %arg1: i32) -> (i32, i32) {
    %c0_i32 = arith.constant 0 : i32
    return %arg0, %arg1 : i32, i32
  }
  func.func @transform_1(%arg0: i32, %arg1: i32) -> (i32, i32) {
    %c0_i32 = arith.constant 0 : i32
    %c0_i32_0 = arith.constant 0 : i32
    return %arg1, %c0_i32 : i32, i32
  }
  func.func @transform_2(%arg0: i32, %arg1: i32) -> (i32, i32) {
    %c0_i32 = arith.constant 0 : i32
    %c0_i32_0 = arith.constant 0 : i32
    return %arg0, %c0_i32 : i32, i32
  }
  func.func @transform_3(%arg0: i32, %arg1: i32) -> (i32, i32) {
    %c0_i32 = arith.constant 0 : i32
    %c0_i32_0 = arith.constant 0 : i32
    %c0_i32_1 = arith.constant 0 : i32
    return %c0_i32, %c0_i32_0 : i32, i32
  }
  func.func @transform_4(%arg0: i32, %arg1: i32) -> (i32, i32) {
    %c0_i32 = arith.constant 0 : i32
    %c0_i32_0 = arith.constant 0 : i32
    %c0_i32_1 = arith.constant 0 : i32
    return %c0_i32, %c0_i32_0 : i32, i32
  }
  func.func @transform_5(%arg0: i32, %arg1: i32) -> (i32, i32) {
    %c0_i32 = arith.constant 0 : i32
    %c0_i32_0 = arith.constant 0 : i32
    %c0_i32_1 = arith.constant 0 : i32
    return %c0_i32, %c0_i32_0 : i32, i32
  }
  func.func @transform_6(%arg0: i32, %arg1: i32) -> (i32, i32) {
    %c0_i32 = arith.constant 0 : i32
    %c0_i32_0 = arith.constant 0 : i32
    return %arg0, %c0_i32 : i32, i32
  }
}

module attributes {stable_mosaic.version = 11 : i64} {
  func.func @_gcn_pass2_kernel(%arg0: i32, %arg1: i32, %arg2: memref<128x128xi8, #tpu.memory_space<vmem>>, %arg3: memref<128x128xf32, #tpu.memory_space<vmem>>, %arg4: memref<128x1xf32, #tpu.memory_space<vmem>>, %arg5: memref<1x128xf32, #tpu.memory_space<vmem>>, %arg6: memref<128x128xf32, #tpu.memory_space<vmem>>, %arg7: memref<1x128xf32, #tpu.memory_space<vmem>>, %arg8: memref<128x128xf32, #tpu.memory_space<vmem>>, %arg9: memref<128x128xf32, #tpu.memory_space<vmem>>) attributes {dimension_semantics = [#tpu.dimension_semantics<parallel>, #tpu.dimension_semantics<arbitrary>], iteration_bounds = array<i64: 2, 2>, scalar_prefetch = 0 : i64, scratch_operands = 1 : i64, tpu.core_type = #tpu.core_type<tc>, window_params = [{transform_indices = @transform_0, window_bounds = array<i64: 128, 128>}, {transform_indices = @transform_1, window_bounds = array<i64: 128, 128>}, {transform_indices = @transform_2, window_bounds = array<i64: 128, 1>}, {pipeline_mode = #tpu.pipeline_mode<synchronous>, transform_indices = @transform_3, window_bounds = array<i64: 1, 128>}, {pipeline_mode = #tpu.pipeline_mode<synchronous>, transform_indices = @transform_4, window_bounds = array<i64: 128, 128>}, {pipeline_mode = #tpu.pipeline_mode<synchronous>, transform_indices = @transform_5, window_bounds = array<i64: 1, 128>}, {transform_indices = @transform_6, window_bounds = array<i64: 128, 128>}]} {
    %c0_i32 = arith.constant 0 : i32
    %0 = arith.cmpi eq, %arg1, %c0_i32 : i32
    %1 = arith.extui %0 : i1 to i32
    %c0_i32_0 = arith.constant 0 : i32
    %2 = arith.cmpi ne, %1, %c0_i32_0 : i32
    scf.if %2 {
      %cst_9 = arith.constant 0.000000e+00 : f32
      %13 = vector.broadcast %cst_9 : f32 to vector<128x128xf32>
      %c0_10 = arith.constant 0 : index
      %c0_11 = arith.constant 0 : index
      %14 = vector.load %arg9[%c0_10, %c0_11] : memref<128x128xf32, #tpu.memory_space<vmem>>, vector<128x128xf32>
      tpu.vector_store %arg9[%c0_10, %c0_11], %13 {strides = array<i32>} : memref<128x128xf32, #tpu.memory_space<vmem>>, vector<128x128xf32>,
    } else {
    }
    %c0 = arith.constant 0 : index
    %c0_1 = arith.constant 0 : index
    %3 = vector.load %arg9[%c0, %c0_1] : memref<128x128xf32, #tpu.memory_space<vmem>>, vector<128x128xf32>
    %c0_2 = arith.constant 0 : index
    %c0_3 = arith.constant 0 : index
    %4 = vector.load %arg2[%c0_2, %c0_3] : memref<128x128xi8, #tpu.memory_space<vmem>>, vector<128x128xi8>
    %5 = arith.sitofp %4 : vector<128x128xi8> to vector<128x128xf32>
    %c0_4 = arith.constant 0 : index
    %c0_5 = arith.constant 0 : index
    %6 = vector.load %arg3[%c0_4, %c0_5] : memref<128x128xf32, #tpu.memory_space<vmem>>, vector<128x128xf32>
    %cst = arith.constant dense<0.000000e+00> : vector<128x128xf32>
    %7 = tpu.matmul %5, %6, %cst {dimension_numbers = #tpu.dot_dimension_numbers<[1], [0], [0], [1], [0, 0, 1, 1], [], []>} : vector<128x128xf32>, vector<128x128xf32>, vector<128x128xf32> -> vector<128x128xf32>
    %8 = arith.addf %3, %7 : vector<128x128xf32>
    %c0_6 = arith.constant 0 : index
    %c0_7 = arith.constant 0 : index
    %9 = vector.load %arg9[%c0_6, %c0_7] : memref<128x128xf32, #tpu.memory_space<vmem>>, vector<128x128xf32>
    tpu.vector_store %arg9[%c0_6, %c0_7], %8 {strides = array<i32>} : memref<128x128xf32, #tpu.memory_space<vmem>>, vector<128x128xf32>,
    %c1_i32 = arith.constant 1 : i32
    %10 = arith.cmpi eq, %arg1, %c1_i32 : i32
    %11 = arith.extui %10 : i1 to i32
    %c0_i32_8 = arith.constant 0 : i32
    %12 = arith.cmpi ne, %11, %c0_i32_8 : i32
    scf.if %12 {
      %c0_9 = arith.constant 0 : index
      %c0_10 = arith.constant 0 : index
      %13 = vector.load %arg4[%c0_9, %c0_10] : memref<128x1xf32, #tpu.memory_space<vmem>>, vector<128x1xf32>
      %c0_11 = arith.constant 0 : index
      %c0_12 = arith.constant 0 : index
      %14 = vector.load %arg9[%c0_11, %c0_12] : memref<128x128xf32, #tpu.memory_space<vmem>>, vector<128x128xf32>
      %15 = vector.broadcast %13 : vector<128x1xf32> to vector<128x128xf32>
      %16 = arith.mulf %15, %14 : vector<128x128xf32>
      %c0_13 = arith.constant 0 : index
      %c0_14 = arith.constant 0 : index
      %17 = vector.load %arg5[%c0_13, %c0_14] : memref<1x128xf32, #tpu.memory_space<vmem>>, vector<1x128xf32>
      %18 = vector.broadcast %17 : vector<1x128xf32> to vector<128x128xf32>
      %19 = arith.addf %16, %18 : vector<128x128xf32>
      %c0_15 = arith.constant 0 : index
      %c0_16 = arith.constant 0 : index
      %20 = vector.load %arg6[%c0_15, %c0_16] : memref<128x128xf32, #tpu.memory_space<vmem>>, vector<128x128xf32>
      %cst_17 = arith.constant dense<0.000000e+00> : vector<128x128xf32>
      %21 = tpu.matmul %19, %20, %cst_17 {dimension_numbers = #tpu.dot_dimension_numbers<[1], [0], [0], [1], [0, 0, 1, 1], [], []>} : vector<128x128xf32>, vector<128x128xf32>, vector<128x128xf32> -> vector<128x128xf32>
      %c0_18 = arith.constant 0 : index
      %c0_19 = arith.constant 0 : index
      %22 = vector.load %arg7[%c0_18, %c0_19] : memref<1x128xf32, #tpu.memory_space<vmem>>, vector<1x128xf32>
      %23 = vector.broadcast %22 : vector<1x128xf32> to vector<128x128xf32>
      %24 = arith.addf %21, %23 : vector<128x128xf32>
      %c0_20 = arith.constant 0 : index
      %c0_21 = arith.constant 0 : index
      %25 = vector.load %arg8[%c0_20, %c0_21] : memref<128x128xf32, #tpu.memory_space<vmem>>, vector<128x128xf32>
      tpu.vector_store %arg8[%c0_20, %c0_21], %24 {strides = array<i32>} : memref<128x128xf32, #tpu.memory_space<vmem>>, vector<128x128xf32>,
    } else {
    }
    return
  }
  func.func @transform_0(%arg0: i32, %arg1: i32) -> (i32, i32) {
    %c0_i32 = arith.constant 0 : i32
    return %arg0, %arg1 : i32, i32
  }
  func.func @transform_1(%arg0: i32, %arg1: i32) -> (i32, i32) {
    %c0_i32 = arith.constant 0 : i32
    %c0_i32_0 = arith.constant 0 : i32
    return %arg1, %c0_i32 : i32, i32
  }
  func.func @transform_2(%arg0: i32, %arg1: i32) -> (i32, i32) {
    %c0_i32 = arith.constant 0 : i32
    %c0_i32_0 = arith.constant 0 : i32
    return %arg0, %c0_i32 : i32, i32
  }
  func.func @transform_3(%arg0: i32, %arg1: i32) -> (i32, i32) {
    %c0_i32 = arith.constant 0 : i32
    %c0_i32_0 = arith.constant 0 : i32
    %c0_i32_1 = arith.constant 0 : i32
    return %c0_i32, %c0_i32_0 : i32, i32
  }
  func.func @transform_4(%arg0: i32, %arg1: i32) -> (i32, i32) {
    %c0_i32 = arith.constant 0 : i32
    %c0_i32_0 = arith.constant 0 : i32
    %c0_i32_1 = arith.constant 0 : i32
    return %c0_i32, %c0_i32_0 : i32, i32
  }
  func.func @transform_5(%arg0: i32, %arg1: i32) -> (i32, i32) {
    %c0_i32 = arith.constant 0 : i32
    %c0_i32_0 = arith.constant 0 : i32
    %c0_i32_1 = arith.constant 0 : i32
    return %c0_i32, %c0_i32_0 : i32, i32
  }
  func.func @transform_6(%arg0: i32, %arg1: i32) -> (i32, i32) {
    %c0_i32 = arith.constant 0 : i32
    %c0_i32_0 = arith.constant 0 : i32
    return %arg0, %c0_i32 : i32, i32
  }
}

</mosaic_0001>

<llo_original>
// kernel: gcl_forward.3
$region0: #{gcl_forward.3}
  #allocation0 [shape = 'u32[]', space=smem, size = 0x4, offset = 0x4, fixed_abs, tag = 'smem constant byte address 0x4 - core index']
  #allocation1 [shape = 'u32[144,128]{1,0:T(1,128)}', space=vmem, size = 0x12000, scoped, tag = 'internal scratch']
  #allocation2 [shape = 'f32[128,128]{1,0:T(8,128)}', space=vmem, size = 0x10000, scoped, tag = 'scratch operand']
  %s0 = inlined_call_operand.vmem [shape: s8[256,256], index: 0, kind: input, shape index: {}]
  %s1 = inlined_call_operand.vmem [shape: f32[256,128], index: 1, kind: input, shape index: {}]
  %s2 = inlined_call_operand.vmem [shape: f32[256,1], index: 2, kind: input, shape index: {}]
  %s3 = inlined_call_operand.vmem [shape: f32[1,128], index: 3, kind: input, shape index: {}]
  %s4 = inlined_call_operand.vmem [shape: f32[128,128], index: 4, kind: input, shape index: {}]
  %s5 = inlined_call_operand.vmem [shape: f32[1,128], index: 5, kind: input, shape index: {}]
  %s6 = inlined_call_operand.vmem [shape: f32[256,128], index: 6, kind: output, shape index: {}]
  %s7 = sld [smem:[#allocation0]]
  $region103: #{gcl_forward.3} parent=0
    _
  %s9 = ssub.s32 1, %s7
  %s10 = scalar_select 0, %s9, %s7
  $region1: #{gcl_forward.3} parent=0
    #allocation3 [shape = 'u8[32768]{0}', space=vmem, size = 0x8000, scoped, tag = 'input window, operand 0']
    loop: start=0, step=1, limit=6
    $region2: #{gcl_forward.3} parent=1 // loop_pre_header
      _
    $region3: #{gcl_forward.3} parent=1 // loop_header
      %s12 = sphi 0, %s16
      %p13 = scmp.ge.s32.totalorder %s12, 6
      %s19 = sphi 0, %s31
      %s20 = sphi 0, %s27
      %s21 = sphi 0, %s19
      %s22 = sphi 0, %s20
      %s23 = sphi 0, %s21
      %s24 = sphi 0, %s22
      %s36 = sphi 0, %s38
      %s39 = sphi 0, %s36
      %s40 = sphi 0, %s39
      %s56 = sphi 0, %s40
      %s62 = sphi 0, %s64
      %s65 = sphi 0, %s62
      %s66 = sphi 0, %s65
      %s82 = sphi 0, %s66
      %s88 = sphi 0, %s90
      %s91 = sphi 0, %s88
      %s92 = sphi 0, %s91
      %s108 = sphi 0, %s92
      %s112 = sphi 0, %s112
      %s114 = sphi 0, %s112
      %s115 = sphi 0, %s114
      %s129 = sphi 0, %s115
      %s133 = sphi 0, %s133
      %s135 = sphi 0, %s133
      %s136 = sphi 0, %s135
      %s150 = sphi 0, %s136
      %s154 = sphi 0, %s154
      %s156 = sphi 0, %s154
      %s157 = sphi 0, %s156
      %s171 = sphi 0, %s157
      %s177 = sphi 0, %s179
      %s180 = sphi 0, %s177
      %s181 = sphi 0, %s180
      %s197 = sphi 0, %s181
    $region4: #{gcl_forward.3} parent=1 // loop_header_branch
      %15 = sbr.rel (%p13) target = $region8
    $region5: #{gcl_forward.3} parent=1 // loop_body
      %s17 = ssub.s32 %s12, 1
      %s18 = ssub.s32 %s12, 2
      %s25 = sadd.s32 1, %s20
      %p26 = scmp.ge.s32.totalorder %s25, 2
      %s27 = scalar_select %p26, 0, %s25
      %s28 = sadd.s32 1, %s19
      %s29 = scalar_select %p26, %s28, %s19
      %p30 = scmp.ge.s32.totalorder %s29, 2
      %s31 = scalar_select %p30, 0, %s29
      %s32 = ssub.s32 %s19, %s31
      %s33 = ssub.s32 %s20, %s27
      %s34 = sor.u32 %s32, %s33
      %p35 = scmp.eq.s32.totalorder %s34, 0
      %s37 = sadd.s32 %s36, 1
      %s38 = scalar_select %p35, %s36, %s37
      %p41 = pneg %p35
      %p42 = scmp.eq.s32.totalorder %s12, 3
      %p43 = por %p41, %p42
      %p44 = scmp.ne.s32.totalorder %s36, %s39
      %p45 = scmp.eq.s32.totalorder %s12, 0
      %p46 = por %p44, %p45
      %p47 = scmp.ne.s32.totalorder %s36, %s39
      %p48 = scmp.eq.s32.totalorder %s17, 3
      %p49 = por %p47, %p48
      %p50 = scmp.ne.s32.totalorder %s39, %s40
      %p51 = scmp.eq.s32.totalorder %s17, 0
      %p52 = por %p50, %p51
      %p53 = scmp.ne.s32.totalorder %s39, %s40
      %p54 = scmp.eq.s32.totalorder %s18, 3
      %p55 = por %p53, %p54
      %p57 = scmp.ne.s32.totalorder %s40, %s56
      %p58 = scmp.eq.s32.totalorder %s18, 0
      %p59 = por %p57, %p58
      %s60 = ssub.s32 %s20, %s27
      %p61 = scmp.eq.s32.totalorder %s60, 0
      %s63 = sadd.s32 %s62, 1
      %s64 = scalar_select %p61, %s62, %s63
      %p67 = pneg %p61
      %p68 = scmp.eq.s32.totalorder %s12, 3
      %p69 = por %p67, %p68
      %p70 = scmp.ne.s32.totalorder %s62, %s65
      %p71 = scmp.eq.s32.totalorder %s12, 0
      %p72 = por %p70, %p71
      %p73 = scmp.ne.s32.totalorder %s62, %s65
      %p74 = scmp.eq.s32.totalorder %s17, 3
      %p75 = por %p73, %p74
      %p76 = scmp.ne.s32.totalorder %s65, %s66
      %p77 = scmp.eq.s32.totalorder %s17, 0
      %p78 = por %p76, %p77
      %p79 = scmp.ne.s32.totalorder %s65, %s66
      %p80 = scmp.eq.s32.totalorder %s18, 3
      %p81 = por %p79, %p80
      %p83 = scmp.ne.s32.totalorder %s66, %s82
      %p84 = scmp.eq.s32.totalorder %s18, 0
      %p85 = por %p83, %p84
      %s86 = ssub.s32 %s19, %s31
      %p87 = scmp.eq.s32.totalorder %s86, 0
      %s89 = sadd.s32 %s88, 1
      %s90 = scalar_select %p87, %s88, %s89
      %p93 = pneg %p87
      %p94 = scmp.eq.s32.totalorder %s12, 3
      %p95 = por %p93, %p94
      %p96 = scmp.ne.s32.totalorder %s88, %s91
      %p97 = scmp.eq.s32.totalorder %s12, 0
      %p98 = por %p96, %p97
      %p99 = scmp.ne.s32.totalorder %s88, %s91
      %p100 = scmp.eq.s32.totalorder %s17, 3
      %p101 = por %p99, %p100
      %p102 = scmp.ne.s32.totalorder %s91, %s92
      %p103 = scmp.eq.s32.totalorder %s17, 0
      %p104 = por %p102, %p103
      %p105 = scmp.ne.s32.totalorder %s91, %s92
      %p106 = scmp.eq.s32.totalorder %s18, 3
      %p107 = por %p105, %p106
      %p109 = scmp.ne.s32.totalorder %s92, %s108
      %p110 = scmp.eq.s32.totalorder %s18, 0
      %p111 = por %p109, %p110
      %s113 = sadd.s32 %s112, 1
      %p116 = scmp.eq.s32.totalorder %s12, 3
      %p117 = scmp.ne.s32.totalorder %s112, %s114
      %p118 = scmp.eq.s32.totalorder %s12, 0
      %p119 = por %p117, %p118
      %p120 = scmp.ne.s32.totalorder %s112, %s114
      %p121 = scmp.eq.s32.totalorder %s17, 3
      %p122 = por %p120, %p121
      %p123 = scmp.ne.s32.totalorder %s114, %s115
      %p124 = scmp.eq.s32.totalorder %s17, 0
      %p125 = por %p123, %p124
      %p126 = scmp.ne.s32.totalorder %s114, %s115
      %p127 = scmp.eq.s32.totalorder %s18, 3
      %p128 = por %p126, %p127
      %p130 = scmp.ne.s32.totalorder %s115, %s129
      %p131 = scmp.eq.s32.totalorder %s18, 0
      %p132 = por %p130, %p131
      %s134 = sadd.s32 %s133, 1
      %p137 = scmp.eq.s32.totalorder %s12, 3
      %p138 = scmp.ne.s32.totalorder %s133, %s135
      %p139 = scmp.eq.s32.totalorder %s12, 0
      %p140 = por %p138, %p139
      %p141 = scmp.ne.s32.totalorder %s133, %s135
      %p142 = scmp.eq.s32.totalorder %s17, 3
      %p143 = por %p141, %p142
      %p144 = scmp.ne.s32.totalorder %s135, %s136
      %p145 = scmp.eq.s32.totalorder %s17, 0
      %p146 = por %p144, %p145
      %p147 = scmp.ne.s32.totalorder %s135, %s136
      %p148 = scmp.eq.s32.totalorder %s18, 3
      %p149 = por %p147, %p148
      %p151 = scmp.ne.s32.totalorder %s136, %s150
      %p152 = scmp.eq.s32.totalorder %s18, 0
      %p153 = por %p151, %p152
      %s155 = sadd.s32 %s154, 1
      %p158 = scmp.eq.s32.totalorder %s12, 3
      %p159 = scmp.ne.s32.totalorder %s154, %s156
      %p160 = scmp.eq.s32.totalorder %s12, 0
      %p161 = por %p159, %p160
      %p162 = scmp.ne.s32.totalorder %s154, %s156
      %p163 = scmp.eq.s32.totalorder %s17, 3
      %p164 = por %p162, %p163
      %p165 = scmp.ne.s32.totalorder %s156, %s157
      %p166 = scmp.eq.s32.totalorder %s17, 0
      %p167 = por %p165, %p166
      %p168 = scmp.ne.s32.totalorder %s156, %s157
      %p169 = scmp.eq.s32.totalorder %s18, 3
      %p170 = por %p168, %p169
      %p172 = scmp.ne.s32.totalorder %s157, %s171
      %p173 = scmp.eq.s32.totalorder %s18, 0
      %p174 = por %p172, %p173
      %s175 = ssub.s32 %s19, %s31
      %p176 = scmp.eq.s32.totalorder %s175, 0
      %s178 = sadd.s32 %s177, 1
      %s179 = scalar_select %p176, %s177, %s178
      %p182 = pneg %p176
      %p183 = scmp.eq.s32.totalorder %s12, 3
      %p184 = por %p182, %p183
      %p185 = scmp.ne.s32.totalorder %s177, %s180
      %p186 = scmp.eq.s32.totalorder %s12, 0
      %p187 = por %p185, %p186
      %p188 = scmp.ne.s32.totalorder %s177, %s180
      %p189 = scmp.eq.s32.totalorder %s17, 3
      %p190 = por %p188, %p189
      %p191 = scmp.ne.s32.totalorder %s180, %s181
      %p192 = scmp.eq.s32.totalorder %s17, 0
      %p193 = por %p191, %p192
      %p194 = scmp.ne.s32.totalorder %s180, %s181
      %p195 = scmp.eq.s32.totalorder %s18, 3
      %p196 = por %p194, %p195
      %p198 = scmp.ne.s32.totalorder %s181, %s197
      %p199 = scmp.eq.s32.totalorder %s18, 0
      %p200 = por %p198, %p199
      %p201 = scmp.le.s32.totalorder 1, %s12
      %p202 = scmp.lt.s32.totalorder %s12, 5
      %p203 = pnand %p201, %p202
      %p204 = pneg %p203
      // Predicated region
      $region9: #{gcl_forward.3} parent=5 // pred_check
        _
      $region10: #{gcl_forward.3} parent=5 // pred_check_branch
        %206 = sbr.rel (%p203) target = $region12
      $region11: #{gcl_forward.3} parent=5 // pred_region
        %s207 = ssub.s32 %s12, 1
        // Predicated region
        $region13: #{gcl_forward.3} parent=11 // pred_check
          %p208 = pneg %p125
        $region14: #{gcl_forward.3} parent=11 // pred_check_branch
          %210 = sbr.rel (%p208) target = $region16
        $region15: #{gcl_forward.3} parent=11 // pred_region
          _
        $region16: #{gcl_forward.3} parent=11 // pred_fallthru
          _
        // Predicated region
        $region17: #{gcl_forward.3} parent=11 // pred_check
          %p211 = pneg %p146
        $region18: #{gcl_forward.3} parent=11 // pred_check_branch
          %213 = sbr.rel (%p211) target = $region20
        $region19: #{gcl_forward.3} parent=11 // pred_region
          _
        $region20: #{gcl_forward.3} parent=11 // pred_fallthru
          _
        // Predicated region
        $region21: #{gcl_forward.3} parent=11 // pred_check
          %p214 = pneg %p167
        $region22: #{gcl_forward.3} parent=11 // pred_check_branch
          %216 = sbr.rel (%p214) target = $region24
        $region23: #{gcl_forward.3} parent=11 // pred_region
          _
        $region24: #{gcl_forward.3} parent=11 // pred_fallthru
          _
      $region12: #{gcl_forward.3} parent=5 // pred_fallthru
        _
      %p217 = scmp.lt.s32.totalorder %s12, 4
      // Predicated region
      $region25: #{gcl_forward.3} parent=5 // pred_check
        %p218 = pneg %p217
      $region26: #{gcl_forward.3} parent=5 // pred_check_branch
        %220 = sbr.rel (%p218) target = $region28
      $region27: #{gcl_forward.3} parent=5 // pred_region
        // Predicated region
        $region29: #{gcl_forward.3} parent=27 // pred_check
          %p221 = pneg %p46
        $region30: #{gcl_forward.3} parent=27 // pred_check_branch
          %223 = sbr.rel (%p221) target = $region32
        $region31: #{gcl_forward.3} parent=27 // pred_region
          %s224 = sand.u32 %s36, 1
          %s225 = sand.u32 %s36, 1
          %s226 = smul.addr %s225, 32
          %s227 = scalar_lea.vmem [#allocation3], %s226
          %s228 = smul.u32 4, %s19
          %s229 = smul.addr %s228, 2
          %s230 = sadd.s32 %s20, %s229
          %s231 = smul.addr %s230, 8
          %s232 = scalar_lea.vmem %s0, %s231
          // Predicated region
          $region33: #{gcl_forward.3} parent=31 // pred_check
            _
          $region34: #{gcl_forward.3} parent=31 // pred_check_branch
            %234 = sbr.rel (0) target = $region36
          $region35: #{gcl_forward.3} parent=31 // pred_region
            // Predicated region
            $region37: #{gcl_forward.3} parent=35 // pred_check
              _
            $region38: #{gcl_forward.3} parent=35 // pred_check_branch
              %236 = sbr.rel (0) target = $region40
            $region39: #{gcl_forward.3} parent=35 // pred_region
              // Predicated region
              $region52: #{gcl_forward.3} parent=39 // pred_check
                _
              $region53: #{gcl_forward.3} parent=39 // pred_check_branch
                %257 = sbr.rel (0) target = $region55
              $region54: #{gcl_forward.3} parent=39 // pred_region
                loop: start=0, step=1, limit=1
                $region56: #{gcl_forward.3} parent=54 // loop_pre_header
                  _
                $region57: #{gcl_forward.3} parent=54 // loop_header
                  %s259 = sphi 0, %s263
                  %p260 = scmp.ge.s32.totalorder %s259, 1
                  %s264 = sphi %s232, %s232
                  %s265 = sphi %s227, %s227
                $region58: #{gcl_forward.3} parent=54 // loop_header_branch
                  %262 = sbr.rel (%p260) target = $region62
                $region59: #{gcl_forward.3} parent=54 // loop_body
                  %v266 = vld [vmem:[%s264] sm:$0xff]
                  %267 = vst [vmem:[%s265] sm:$0xff] %v266
                  %v268 = vld [vmem:[%s264 + $0x10] sm:$0xff]
                  %269 = vst [vmem:[%s265 + $0x8] sm:$0xff] %v268
                  %v270 = vld [vmem:[%s264 + $0x20] sm:$0xff]
                  %271 = vst [vmem:[%s265 + $0x10] sm:$0xff] %v270
                  %v272 = vld [vmem:[%s264 + $0x30] sm:$0xff]
                  %273 = vst [vmem:[%s265 + $0x18] sm:$0xff] %v272
                $region60: #{gcl_forward.3} parent=54 // loop_footer
                  %s263 = sadd.s32 1, %s259
                $region61: #{gcl_forward.3} parent=54 // loop_footer_branch
                  %258 = sbr.rel target = $region57
                $region62: #{gcl_forward.3} parent=54 // loop_exit
                  _
              $region55: #{gcl_forward.3} parent=39 // pred_fallthru
                _
              // Predicated region
              $region63: #{gcl_forward.3} parent=39 // pred_check
                _
              $region64: #{gcl_forward.3} parent=39 // pred_check_branch
                %275 = sbr.rel target = $region66
              $region65: #{gcl_forward.3} parent=39 // pred_region
                _
              $region66: #{gcl_forward.3} parent=39 // pred_fallthru
                _
            $region40: #{gcl_forward.3} parent=35 // pred_fallthru
              _
            // Predicated region
            $region41: #{gcl_forward.3} parent=35 // pred_check
              _
            $region42: #{gcl_forward.3} parent=35 // pred_check_branch
              %238 = sbr.rel target = $region44
            $region43: #{gcl_forward.3} parent=35 // pred_region
              loop: start=0, step=1, limit=1
              $region45: #{gcl_forward.3} parent=43 // loop_pre_header
                _
              $region46: #{gcl_forward.3} parent=43 // loop_header
                %s241 = sphi 0, %s245
                %p242 = scmp.ge.s32.totalorder %s241, 1
                %s246 = sphi %s232, %s232
                %s247 = sphi %s227, %s227
              $region47: #{gcl_forward.3} parent=43 // loop_header_branch
                %244 = sbr.rel (%p242) target = $region51
              $region48: #{gcl_forward.3} parent=43 // loop_body
                %v248 = vld [vmem:[%s246] sm:$0xff]
                %249 = vst [vmem:[%s247] sm:$0xff] %v248
                %v250 = vld [vmem:[%s246 + $0x10] sm:$0xff]
                %251 = vst [vmem:[%s247 + $0x8] sm:$0xff] %v250
                %v252 = vld [vmem:[%s246 + $0x20] sm:$0xff]
                %253 = vst [vmem:[%s247 + $0x10] sm:$0xff] %v252
                %v254 = vld [vmem:[%s246 + $0x30] sm:$0xff]
                %255 = vst [vmem:[%s247 + $0x18] sm:$0xff] %v254
              $region49: #{gcl_forward.3} parent=43 // loop_footer
                %s245 = sadd.s32 1, %s241
              $region50: #{gcl_forward.3} parent=43 // loop_footer_branch
                %240 = sbr.rel target = $region46
              $region51: #{gcl_forward.3} parent=43 // loop_exit
                _
            $region44: #{gcl_forward.3} parent=35 // pred_fallthru
              _
          $region36: #{gcl_forward.3} parent=31 // pred_fallthru
            _
          %276 = vnop
        $region32: #{gcl_forward.3} parent=27 // pred_fallthru
          _
        // Predicated region
        $region67: #{gcl_forward.3} parent=27 // pred_check
          %p277 = pneg %p72
        $region68: #{gcl_forward.3} parent=27 // pred_check_branch
          %279 = sbr.rel (%p277) target = $region70
        $region69: #{gcl_forward.3} parent=27 // pred_region
          %s280 = smul.u32 16, %s20
          %p281 = scmp.lt.s32.totalorder %s280, 31
          %s282 = scalar_select %p281, %s280, 31
          %s283 = smul.addr %s282, 8
          %s284 = scalar_lea.vmem %s1, %s283
          %s285 = smul.u32 16, %s20
        $region70: #{gcl_forward.3} parent=27 // pred_fallthru
          _
        // Predicated region
        $region71: #{gcl_forward.3} parent=27 // pred_check
          %p286 = pneg %p98
        $region72: #{gcl_forward.3} parent=27 // pred_check_branch
          %288 = sbr.rel (%p286) target = $region74
        $region73: #{gcl_forward.3} parent=27 // pred_region
          %s289 = smul.u32 16, %s19
          %p290 = scmp.lt.s32.totalorder %s289, 31
          %s291 = scalar_select %p290, %s289, 31
          %s292 = smul.addr %s291, 8
          %s293 = scalar_lea.vmem %s2, %s292
          %s294 = smul.u32 16, %s19
        $region74: #{gcl_forward.3} parent=27 // pred_fallthru
          _
      $region28: #{gcl_forward.3} parent=5 // pred_fallthru
        _
      %p295 = scmp.le.s32.totalorder 1, %s12
      %p296 = scmp.lt.s32.totalorder %s12, 5
      %p297 = pnand %p295, %p296
      %p298 = pneg %p297
      // Predicated region
      $region75: #{gcl_forward.3} parent=5 // pred_check
        _
      $region76: #{gcl_forward.3} parent=5 // pred_check_branch
        %300 = sbr.rel (%p297) target = $region78
      $region77: #{gcl_forward.3} parent=5 // pred_region
        %s301 = ssub.s32 %s12, 1
        %s302 = sand.u32 %s39, 1
        %s303 = sand.u32 %s39, 1
        %s304 = smul.addr %s303, 32
        %s305 = scalar_lea.vmem [#allocation3], %s304
        // Predicated region
        $region79: #{gcl_forward.3} parent=77 // pred_check
          %p306 = pneg %p52
        $region80: #{gcl_forward.3} parent=77 // pred_check_branch
          %308 = sbr.rel (%p306) target = $region82
        $region81: #{gcl_forward.3} parent=77 // pred_region
          _
        $region82: #{gcl_forward.3} parent=77 // pred_fallthru
          _
        %s309 = sand.u32 %s39, 1
        %s310 = sand.u32 %s39, 1
        %s311 = smul.addr %s310, 32
        %s312 = scalar_lea.vmem [#allocation3], %s311
        %p313 = pneg %p52
        %p314 = pneg %p49
        %s315 = smul.u32 16, %s22
        %p316 = scmp.lt.s32.totalorder %s315, 31
        %s317 = scalar_select %p316, %s315, 31
        %s318 = smul.addr %s317, 8
        %s319 = scalar_lea.vmem %s1, %s318
        %p320 = pneg %p78
        %p321 = pneg %p75
        %s322 = smul.u32 16, %s21
        %p323 = scmp.lt.s32.totalorder %s322, 31
        %s324 = scalar_select %p323, %s322, 31
        %s325 = smul.addr %s324, 8
        %s326 = scalar_lea.vmem %s2, %s325
        %p327 = pneg %p104
        %p328 = pneg %p101
        %p329 = pneg %p125
        %p330 = pneg %p122
        %p331 = pneg %p146
        %p332 = pneg %p143
        %p333 = pneg %p167
        %p334 = pneg %p164
        %p335 = pneg %p193
        %p336 = pneg %p190
        %s337 = smul.u32 16, %s21
        %p338 = scmp.lt.s32.totalorder %s337, 31
        %s339 = scalar_select %p338, %s337, 31
        %s340 = smul.addr %s339, 8
        %s341 = scalar_lea.vmem %s6, %s340
        %s342 = smul.u32 4, %s21
        %s343 = smul.u32 16, %s22
        %p344 = scmp.lt.s32.totalorder %s343, 31
        %s345 = scalar_select %p344, %s343, 31
        %s346 = smul.addr %s345, 8
        %s347 = scalar_lea.vmem %s1, %s346
        %s348 = smul.u32 16, %s22
        %s349 = smul.u32 16, %s21
        %p350 = scmp.lt.s32.totalorder %s349, 31
        %s351 = scalar_select %p350, %s349, 31
        %s352 = smul.addr %s351, 8
        %s353 = scalar_lea.vmem %s2, %s352
        %s354 = smul.u32 16, %s21
        %s355 = smul.u32 16, %s21
        %p356 = scmp.lt.s32.totalorder %s355, 31
        %s357 = scalar_select %p356, %s355, 31
        %s358 = smul.addr %s357, 8
        %s359 = scalar_lea.vmem %s6, %s358
        %s360 = smul.u32 16, %s21
        %p361 = scmp.eq.s32.totalorder %s22, 0
        // Predicated region
        $region83: #{gcl_forward.3} parent=77 // pred_check
          %p362 = pneg %p361
        $region84: #{gcl_forward.3} parent=77 // pred_check_branch
          %364 = sbr.rel (%p362) target = $region86
        $region85: #{gcl_forward.3} parent=77 // pred_region
          %365 = vst [vmem:[#allocation2] sm:$0xff] 0.0
          %366 = vst [vmem:[#allocation2 + $0x8] sm:$0xff] 0.0
          %367 = vst [vmem:[#allocation2 + $0x10] sm:$0xff] 0.0
          %368 = vst [vmem:[#allocation2 + $0x18] sm:$0xff] 0.0
          %369 = vst [vmem:[#allocation2 + $0x20] sm:$0xff] 0.0
          %370 = vst [vmem:[#allocation2 + $0x28] sm:$0xff] 0.0
          %371 = vst [vmem:[#allocation2 + $0x30] sm:$0xff] 0.0
          %372 = vst [vmem:[#allocation2 + $0x38] sm:$0xff] 0.0
          %373 = vst [vmem:[#allocation2 + $0x40] sm:$0xff] 0.0
          %374 = vst [vmem:[#allocation2 + $0x48] sm:$0xff] 0.0
          %375 = vst [vmem:[#allocation2 + $0x50] sm:$0xff] 0.0
          %376 = vst [vmem:[#allocation2 + $0x58] sm:$0xff] 0.0
          %377 = vst [vmem:[#allocation2 + $0x60] sm:$0xff] 0.0
          %378 = vst [vmem:[#allocation2 + $0x68] sm:$0xff] 0.0
          %379 = vst [vmem:[#allocation2 + $0x70] sm:$0xff] 0.0
          %380 = vst [vmem:[#allocation2 + $0x78] sm:$0xff] 0.0
        $region86: #{gcl_forward.3} parent=77 // pred_fallthru
          _
        %v381 = vld [vmem:[#allocation2] sm:$0xff]
        %v382 = vld [vmem:[#allocation2 + $0x8] sm:$0xff]
        %v383 = vld [vmem:[#allocation2 + $0x10] sm:$0xff]
        %v384 = vld [vmem:[#allocation2 + $0x18] sm:$0xff]
        %v385 = vld [vmem:[#allocation2 + $0x20] sm:$0xff]
        %v386 = vld [vmem:[#allocation2 + $0x28] sm:$0xff]
        %v387 = vld [vmem:[#allocation2 + $0x30] sm:$0xff]
        %v388 = vld [vmem:[#allocation2 + $0x38] sm:$0xff]
        %v389 = vld [vmem:[#allocation2 + $0x40] sm:$0xff]
        %v390 = vld [vmem:[#allocation2 + $0x48] sm:$0xff]
        %v391 = vld [vmem:[#allocation2 + $0x50] sm:$0xff]
        %v392 = vld [vmem:[#allocation2 + $0x58] sm:$0xff]
        %v393 = vld [vmem:[#allocation2 + $0x60] sm:$0xff]
        %v394 = vld [vmem:[#allocation2 + $0x68] sm:$0xff]
        %v395 = vld [vmem:[#allocation2 + $0x70] sm:$0xff]
        %v396 = vld [vmem:[#allocation2 + $0x78] sm:$0xff]
        %v397 = vld [vmem:[%s305] sm:$0xff]
        %v398 = vld [vmem:[%s305 + $0x8] sm:$0xff]
        %v399 = vld [vmem:[%s305 + $0x10] sm:$0xff]
        %v400 = vld [vmem:[%s305 + $0x18] sm:$0xff]
        %v401 = vunpack.c.0.s8 %v397
        %v402 = vunpack.c.1.s8 %v397
        %v403 = vunpack.c.2.s8 %v397
        %v404 = vunpack.c.3.s8 %v397
        %v405 = vunpack.c.0.s8 %v398
        %v406 = vunpack.c.1.s8 %v398
        %v407 = vunpack.c.2.s8 %v398
        %v408 = vunpack.c.3.s8 %v398
        %v409 = vunpack.c.0.s8 %v399
        %v410 = vunpack.c.1.s8 %v399
        %v411 = vunpack.c.2.s8 %v399
        %v412 = vunpack.c.3.s8 %v399
        %v413 = vunpack.c.0.s8 %v400
        %v414 = vunpack.c.1.s8 %v400
        %v415 = vunpack.c.2.s8 %v400
        %v416 = vunpack.c.3.s8 %v400
        %v417 = vcvt.s32.f32 %v401
        %v418 = vcvt.s32.f32 %v402
        %v419 = vcvt.s32.f32 %v403
        %v420 = vcvt.s32.f32 %v404
        %v421 = vcvt.s32.f32 %v405
        %v422 = vcvt.s32.f32 %v406
        %v423 = vcvt.s32.f32 %v407
        %v424 = vcvt.s32.f32 %v408
        %v425 = vcvt.s32.f32 %v409
        %v426 = vcvt.s32.f32 %v410
        %v427 = vcvt.s32.f32 %v411
        %v428 = vcvt.s32.f32 %v412
        %v429 = vcvt.s32.f32 %v413
        %v430 = vcvt.s32.f32 %v414
        %v431 = vcvt.s32.f32 %v415
        %v432 = vcvt.s32.f32 %v416
        %v433 = vld [vmem:[%s347] sm:$0xff]
        %v434 = vld [vmem:[%s347 + $0x8] sm:$0xff]
        %v435 = vld [vmem:[%s347 + $0x10] sm:$0xff]
        %v436 = vld [vmem:[%s347 + $0x18] sm:$0xff]
        %v437 = vld [vmem:[%s347 + $0x20] sm:$0xff]
        %v438 = vld [vmem:[%s347 + $0x28] sm:$0xff]
        %v439 = vld [vmem:[%s347 + $0x30] sm:$0xff]
        %v440 = vld [vmem:[%s347 + $0x38] sm:$0xff]
        %v441 = vld [vmem:[%s347 + $0x40] sm:$0xff]
        %v442 = vld [vmem:[%s347 + $0x48] sm:$0xff]
        %v443 = vld [vmem:[%s347 + $0x50] sm:$0xff]
        %v444 = vld [vmem:[%s347 + $0x58] sm:$0xff]
        %v445 = vld [vmem:[%s347 + $0x60] sm:$0xff]
        %v446 = vld [vmem:[%s347 + $0x68] sm:$0xff]
        %v447 = vld [vmem:[%s347 + $0x70] sm:$0xff]
        %v448 = vld [vmem:[%s347 + $0x78] sm:$0xff]
        %449 = vmatprep.subr.mxu0 0.0
        %450 = vmatpush1.msra.mxu0 %v433
        %451 = vmatprep.subr.mxu0 0.0
        %452 = vmatpush1.msra.mxu0 %v434
        %453 = vmatprep.subr.mxu0 0.0
        %454 = vmatpush1.msra.mxu0 %v435
        %455 = vmatprep.subr.mxu0 0.0
        %456 = vmatpush1.msra.mxu0 %v436
        %457 = vmatprep.subr.mxu0 0.0
        %458 = vmatpush1.msra.mxu0 %v437
        %459 = vmatprep.subr.mxu0 0.0
        %460 = vmatpush1.msra.mxu0 %v438
        %461 = vmatprep.subr.mxu0 0.0
        %462 = vmatpush1.msra.mxu0 %v439
        %463 = vmatprep.subr.mxu0 0.0
        %464 = vmatpush1.msra.mxu0 %v440
        %465 = vmatprep.subr.mxu0 0.0
        %466 = vmatpush1.msra.mxu0 %v441
        %467 = vmatprep.subr.mxu0 0.0
        %468 = vmatpush1.msra.mxu0 %v442
        %469 = vmatprep.subr.mxu0 0.0
        %470 = vmatpush1.msra.mxu0 %v443
        %471 = vmatprep.subr.mxu0 0.0
        %472 = vmatpush1.msra.mxu0 %v444
        %473 = vmatprep.subr.mxu0 0.0
        %474 = vmatpush1.msra.mxu0 %v445
        %475 = vmatprep.subr.mxu0 0.0
        %476 = vmatpush1.msra.mxu0 %v446
        %477 = vmatprep.subr.mxu0 0.0
        %478 = vmatpush1.msra.mxu0 %v447
        %479 = vmatprep.subr.mxu0 0.0
        %480 = vmatpush1.msra.mxu0 %v448
        %481 = vmatprep.subr.mxu0 0.0
        %482 = vmatpush1.msra.mxu0 0.0
        %483 = vmatprep.subr.mxu0 0.0
        %484 = vmatpush1.msra.mxu0 0.0
        %485 = vmatprep.subr.mxu0 0.0
        %486 = vmatpush1.msra.mxu0 0.0
        %487 = vmatprep.subr.mxu0 0.0
        %488 = vmatpush1.msra.mxu0 0.0
        %489 = vmatprep.subr.mxu0 0.0
        %490 = vmatpush1.msra.mxu0 0.0
        %491 = vmatprep.subr.mxu0 0.0
        %492 = vmatpush1.msra.mxu0 0.0
        %493 = vmatprep.subr.mxu0 0.0
        %494 = vmatpush1.msra.mxu0 0.0
        %495 = vmatprep.subr.mxu0 0.0
        %496 = vmatpush1.msra.mxu0 0.0
        %497 = vmatprep.subr.mxu0 0.0
        %498 = vmatpush1.msra.mxu0 0.0
        %499 = vmatprep.subr.mxu0 0.0
        %500 = vmatpush1.msra.mxu0 0.0
        %501 = vmatprep.subr.mxu0 0.0
        %502 = vmatpush1.msra.mxu0 0.0
        %503 = vmatprep.subr.mxu0 0.0
        %504 = vmatpush1.msra.mxu0 0.0
        %505 = vmatprep.subr.mxu0 0.0
        %506 = vmatpush1.msra.mxu0 0.0
        %507 = vmatprep.subr.mxu0 0.0
        %508 = vmatpush1.msra.mxu0 0.0
        %509 = vmatprep.subr.mxu0 0.0
        %510 = vmatpush1.msra.mxu0 0.0
        %511 = vmatprep.subr.mxu0 0.0
        %512 = vmatpush1.msra.mxu0 0.0
        %513 = vmatprep.mubr.f32.mxu0 0.0
        %514 = vmatmul.mubr.f32.gmra.mrb[0].mxu0 %v417
        %v515 = vpop.f32.mrb[0].mxu0
        %v516 = vadd.f32 0.0, %v515
        %v517 = vpop.f32.mrb[0].mxu0
        %518 = vmatprep.mubr.f32.mxu0 0.0
        %519 = vmatmul.mubr.f32.gmra.mrb[0].mxu0 %v418
        %v520 = vpop.f32.mrb[0].mxu0
        %v521 = vadd.f32 0.0, %v520
        %v522 = vpop.f32.mrb[0].mxu0
        %523 = vmatprep.mubr.f32.mxu0 0.0
        %524 = vmatmul.mubr.f32.gmra.mrb[0].mxu0 %v419
        %v525 = vpop.f32.mrb[0].mxu0
        %v526 = vadd.f32 0.0, %v525
        %v527 = vpop.f32.mrb[0].mxu0
        %528 = vmatprep.mubr.f32.mxu0 0.0
        %529 = vmatmul.mubr.f32.gmra.mrb[0].mxu0 %v420
        %v530 = vpop.f32.mrb[0].mxu0
        %v531 = vadd.f32 0.0, %v530
        %v532 = vpop.f32.mrb[0].mxu0
        %533 = vmatprep.mubr.f32.mxu0 0.0
        %534 = vmatmul.mubr.f32.gmra.mrb[0].mxu0 %v421
        %v535 = vpop.f32.mrb[0].mxu0
        %v536 = vadd.f32 0.0, %v535
        %v537 = vpop.f32.mrb[0].mxu0
        %538 = vmatprep.mubr.f32.mxu0 0.0
        %539 = vmatmul.mubr.f32.gmra.mrb[0].mxu0 %v422
        %v540 = vpop.f32.mrb[0].mxu0
        %v541 = vadd.f32 0.0, %v540
        %v542 = vpop.f32.mrb[0].mxu0
        %543 = vmatprep.mubr.f32.mxu0 0.0
        %544 = vmatmul.mubr.f32.gmra.mrb[0].mxu0 %v423
        %v545 = vpop.f32.mrb[0].mxu0
        %v546 = vadd.f32 0.0, %v545
        %v547 = vpop.f32.mrb[0].mxu0
        %548 = vmatprep.mubr.f32.mxu0 0.0
        %549 = vmatmul.mubr.f32.gmra.mrb[0].mxu0 %v424
        %v550 = vpop.f32.mrb[0].mxu0
        %v551 = vadd.f32 0.0, %v550
        %v552 = vpop.f32.mrb[0].mxu0
        %553 = vmatprep.mubr.f32.mxu0 0.0
        %554 = vmatmul.mubr.f32.gmra.mrb[0].mxu0 %v425
        %v555 = vpop.f32.mrb[0].mxu0
        %v556 = vadd.f32 0.0, %v555
        %v557 = vpop.f32.mrb[0].mxu0
        %558 = vmatprep.mubr.f32.mxu0 0.0
        %559 = vmatmul.mubr.f32.gmra.mrb[0].mxu0 %v426
        %v560 = vpop.f32.mrb[0].mxu0
        %v561 = vadd.f32 0.0, %v560
        %v562 = vpop.f32.mrb[0].mxu0
        %563 = vmatprep.mubr.f32.mxu0 0.0
        %564 = vmatmul.mubr.f32.gmra.mrb[0].mxu0 %v427
        %v565 = vpop.f32.mrb[0].mxu0
        %v566 = vadd.f32 0.0, %v565
        %v567 = vpop.f32.mrb[0].mxu0
        %568 = vmatprep.mubr.f32.mxu0 0.0
        %569 = vmatmul.mubr.f32.gmra.mrb[0].mxu0 %v428
        %v570 = vpop.f32.mrb[0].mxu0
        %v571 = vadd.f32 0.0, %v570
        %v572 = vpop.f32.mrb[0].mxu0
        %573 = vmatprep.mubr.f32.mxu0 0.0
        %574 = vmatmul.mubr.f32.gmra.mrb[0].mxu0 %v429
        %v575 = vpop.f32.mrb[0].mxu0
        %v576 = vadd.f32 0.0, %v575
        %v577 = vpop.f32.mrb[0].mxu0
        %578 = vmatprep.mubr.f32.mxu0 0.0
        %579 = vmatmul.mubr.f32.gmra.mrb[0].mxu0 %v430
        %v580 = vpop.f32.mrb[0].mxu0
        %v581 = vadd.f32 0.0, %v580
        %v582 = vpop.f32.mrb[0].mxu0
        %583 = vmatprep.mubr.f32.mxu0 0.0
        %584 = vmatmul.mubr.f32.gmra.mrb[0].mxu0 %v431
        %v585 = vpop.f32.mrb[0].mxu0
        %v586 = vadd.f32 0.0, %v585
        %v587 = vpop.f32.mrb[0].mxu0
        %588 = vmatprep.mubr.f32.mxu0 0.0
        %589 = vmatmul.mubr.f32.gmra.mrb[0].mxu0 %v432
        %v590 = vpop.f32.mrb[0].mxu0
        %v591 = vadd.f32 0.0, %v590
        %v592 = vpop.f32.mrb[0].mxu0
        %593 = vdwg.mxu0
        %v594 = vadd.f32 %v381, %v516
        %v595 = vadd.f32 %v382, %v521
        %v596 = vadd.f32 %v383, %v526
        %v597 = vadd.f32 %v384, %v531
        %v598 = vadd.f32 %v385, %v536
        %v599 = vadd.f32 %v386, %v541
        %v600 = vadd.f32 %v387, %v546
        %v601 = vadd.f32 %v388, %v551
        %v602 = vadd.f32 %v389, %v556
        %v603 = vadd.f32 %v390, %v561
        %v604 = vadd.f32 %v391, %v566
        %v605 = vadd.f32 %v392, %v571
        %v606 = vadd.f32 %v393, %v576
        %v607 = vadd.f32 %v394, %v581
        %v608 = vadd.f32 %v395, %v586
        %v609 = vadd.f32 %v396, %v591
        %610 = vst [vmem:[#allocation2] sm:$0xff] %v594
        %611 = vst [vmem:[#allocation2 + $0x8] sm:$0xff] %v595
        %612 = vst [vmem:[#allocation2 + $0x10] sm:$0xff] %v596
        %613 = vst [vmem:[#allocation2 + $0x18] sm:$0xff] %v597
        %614 = vst [vmem:[#allocation2 + $0x20] sm:$0xff] %v598
        %615 = vst [vmem:[#allocation2 + $0x28] sm:$0xff] %v599
        %616 = vst [vmem:[#allocation2 + $0x30] sm:$0xff] %v600
        %617 = vst [vmem:[#allocation2 + $0x38] sm:$0xff] %v601
        %618 = vst [vmem:[#allocation2 + $0x40] sm:$0xff] %v602
        %619 = vst [vmem:[#allocation2 + $0x48] sm:$0xff] %v603
        %620 = vst [vmem:[#allocation2 + $0x50] sm:$0xff] %v604
        %621 = vst [vmem:[#allocation2 + $0x58] sm:$0xff] %v605
        %622 = vst [vmem:[#allocation2 + $0x60] sm:$0xff] %v606
        %623 = vst [vmem:[#allocation2 + $0x68] sm:$0xff] %v607
        %624 = vst [vmem:[#allocation2 + $0x70] sm:$0xff] %v608
        %625 = vst [vmem:[#allocation2 + $0x78] sm:$0xff] %v609
        %p626 = scmp.eq.s32.totalorder %s22, 1
        // Predicated region
        $region87: #{gcl_forward.3} parent=77 // pred_check
          %p627 = pneg %p626
        $region88: #{gcl_forward.3} parent=77 // pred_check_branch
          %629 = sbr.rel (%p627) target = $region90
        $region89: #{gcl_forward.3} parent=77 // pred_region
          %v630 = vld [vmem:[%s353] sm:$0xff]
          %v631 = vld [vmem:[%s353 + $0x8] sm:$0xff]
          %v632 = vld [vmem:[%s353 + $0x10] sm:$0xff]
          %v633 = vld [vmem:[%s353 + $0x18] sm:$0xff]
          %v634 = vld [vmem:[%s353 + $0x20] sm:$0xff]
          %v635 = vld [vmem:[%s353 + $0x28] sm:$0xff]
          %v636 = vld [vmem:[%s353 + $0x30] sm:$0xff]
          %v637 = vld [vmem:[%s353 + $0x38] sm:$0xff]
          %v638 = vld [vmem:[%s353 + $0x40] sm:$0xff]
          %v639 = vld [vmem:[%s353 + $0x48] sm:$0xff]
          %v640 = vld [vmem:[%s353 + $0x50] sm:$0xff]
          %v641 = vld [vmem:[%s353 + $0x58] sm:$0xff]
          %v642 = vld [vmem:[%s353 + $0x60] sm:$0xff]
          %v643 = vld [vmem:[%s353 + $0x68] sm:$0xff]
          %v644 = vld [vmem:[%s353 + $0x70] sm:$0xff]
          %v645 = vld [vmem:[%s353 + $0x78] sm:$0xff]
          %v646 = vld [vmem:[#allocation2] sm:$0xff]
          %v647 = vld [vmem:[#allocation2 + $0x8] sm:$0xff]
          %v648 = vld [vmem:[#allocation2 + $0x10] sm:$0xff]
          %v649 = vld [vmem:[#allocation2 + $0x18] sm:$0xff]
          %v650 = vld [vmem:[#allocation2 + $0x20] sm:$0xff]
          %v651 = vld [vmem:[#allocation2 + $0x28] sm:$0xff]
          %v652 = vld [vmem:[#allocation2 + $0x30] sm:$0xff]
          %v653 = vld [vmem:[#allocation2 + $0x38] sm:$0xff]
          %v654 = vld [vmem:[#allocation2 + $0x40] sm:$0xff]
          %v655 = vld [vmem:[#allocation2 + $0x48] sm:$0xff]
          %v656 = vld [vmem:[#allocation2 + $0x50] sm:$0xff]
          %v657 = vld [vmem:[#allocation2 + $0x58] sm:$0xff]
          %v658 = vld [vmem:[#allocation2 + $0x60] sm:$0xff]
          %v659 = vld [vmem:[#allocation2 + $0x68] sm:$0xff]
          %v660 = vld [vmem:[#allocation2 + $0x70] sm:$0xff]
          %v661 = vld [vmem:[#allocation2 + $0x78] sm:$0xff]
          %663 = vset.pattern.permute.xlu0 0
          %664 = vperm.xlu0 %663, %v630
          %v665 = vpop.permute.xlu0 %664
          %668 = vset.pattern.permute.xlu0 0
          %669 = vperm.xlu0 %668, %v631
          %v670 = vpop.permute.xlu0 %669
          %673 = vset.pattern.permute.xlu0 0
          %674 = vperm.xlu0 %673, %v632
          %v675 = vpop.permute.xlu0 %674
          %678 = vset.pattern.permute.xlu0 0
          %679 = vperm.xlu0 %678, %v633
          %v680 = vpop.permute.xlu0 %679
          %683 = vset.pattern.permute.xlu0 0
          %684 = vperm.xlu0 %683, %v634
          %v685 = vpop.permute.xlu0 %684
          %688 = vset.pattern.permute.xlu0 0
          %689 = vperm.xlu0 %688, %v635
          %v690 = vpop.permute.xlu0 %689
          %693 = vset.pattern.permute.xlu0 0
          %694 = vperm.xlu0 %693, %v636
          %v695 = vpop.permute.xlu0 %694
          %698 = vset.pattern.permute.xlu0 0
          %699 = vperm.xlu0 %698, %v637
          %v700 = vpop.permute.xlu0 %699
          %703 = vset.pattern.permute.xlu0 0
          %704 = vperm.xlu0 %703, %v638
          %v705 = vpop.permute.xlu0 %704
          %708 = vset.pattern.permute.xlu0 0
          %709 = vperm.xlu0 %708, %v639
          %v710 = vpop.permute.xlu0 %709
          %713 = vset.pattern.permute.xlu0 0
          %714 = vperm.xlu0 %713, %v640
          %v715 = vpop.permute.xlu0 %714
          %718 = vset.pattern.permute.xlu0 0
          %719 = vperm.xlu0 %718, %v641
          %v720 = vpop.permute.xlu0 %719
          %723 = vset.pattern.permute.xlu0 0
          %724 = vperm.xlu0 %723, %v642
          %v725 = vpop.permute.xlu0 %724
          %728 = vset.pattern.permute.xlu0 0
          %729 = vperm.xlu0 %728, %v643
          %v730 = vpop.permute.xlu0 %729
          %733 = vset.pattern.permute.xlu0 0
          %734 = vperm.xlu0 %733, %v644
          %v735 = vpop.permute.xlu0 %734
          %738 = vset.pattern.permute.xlu0 0
          %739 = vperm.xlu0 %738, %v645
          %v740 = vpop.permute.xlu0 %739
          %v742 = vmul.f32 %v665, %v646
          %v743 = vmul.f32 %v670, %v647
          %v744 = vmul.f32 %v675, %v648
          %v745 = vmul.f32 %v680, %v649
          %v746 = vmul.f32 %v685, %v650
          %v747 = vmul.f32 %v690, %v651
          %v748 = vmul.f32 %v695, %v652
          %v749 = vmul.f32 %v700, %v653
          %v750 = vmul.f32 %v705, %v654
          %v751 = vmul.f32 %v710, %v655
          %v752 = vmul.f32 %v715, %v656
          %v753 = vmul.f32 %v720, %v657
          %v754 = vmul.f32 %v725, %v658
          %v755 = vmul.f32 %v730, %v659
          %v756 = vmul.f32 %v735, %v660
          %v757 = vmul.f32 %v740, %v661
          %v758 = vld [vmem:[%s3] sm:$0x1]
          %v760 = vlaneseq
          %v761 = vshrl.u32 %v760, 7
          %v762 = vsub.s32 0, %v761
          %v763 = vrot.slane %v758, %v762
          %v765 = vadd.f32 %v742, %v763
          %v766 = vadd.f32 %v743, %v763
          %v767 = vadd.f32 %v744, %v763
          %v768 = vadd.f32 %v745, %v763
          %v769 = vadd.f32 %v746, %v763
          %v770 = vadd.f32 %v747, %v763
          %v771 = vadd.f32 %v748, %v763
          %v772 = vadd.f32 %v749, %v763
          %v773 = vadd.f32 %v750, %v763
          %v774 = vadd.f32 %v751, %v763
          %v775 = vadd.f32 %v752, %v763
          %v776 = vadd.f32 %v753, %v763
          %v777 = vadd.f32 %v754, %v763
          %v778 = vadd.f32 %v755, %v763
          %v779 = vadd.f32 %v756, %v763
          %v780 = vadd.f32 %v757, %v763
          %v781 = vld [vmem:[%s4] sm:$0xff]
          %v782 = vld [vmem:[%s4 + $0x8] sm:$0xff]
          %v783 = vld [vmem:[%s4 + $0x10] sm:$0xff]
          %v784 = vld [vmem:[%s4 + $0x18] sm:$0xff]
          %v785 = vld [vmem:[%s4 + $0x20] sm:$0xff]
          %v786 = vld [vmem:[%s4 + $0x28] sm:$0xff]
          %v787 = vld [vmem:[%s4 + $0x30] sm:$0xff]
          %v788 = vld [vmem:[%s4 + $0x38] sm:$0xff]
          %v789 = vld [vmem:[%s4 + $0x40] sm:$0xff]
          %v790 = vld [vmem:[%s4 + $0x48] sm:$0xff]
          %v791 = vld [vmem:[%s4 + $0x50] sm:$0xff]
          %v792 = vld [vmem:[%s4 + $0x58] sm:$0xff]
          %v793 = vld [vmem:[%s4 + $0x60] sm:$0xff]
          %v794 = vld [vmem:[%s4 + $0x68] sm:$0xff]
          %v795 = vld [vmem:[%s4 + $0x70] sm:$0xff]
          %v796 = vld [vmem:[%s4 + $0x78] sm:$0xff]
          %v797 = vld [vmem:[%s5] sm:$0x1]
          %v799 = vlaneseq
          %v800 = vshrl.u32 %v799, 7
          %v801 = vsub.s32 0, %v800
          %v802 = vrot.slane %v797, %v801
          %804 = vmatprep.subr.mxu0 0.0
          %805 = vmatpush1.msra.mxu0 %v781
          %806 = vmatprep.subr.mxu0 0.0
          %807 = vmatpush1.msra.mxu0 %v782
          %808 = vmatprep.subr.mxu0 0.0
          %809 = vmatpush1.msra.mxu0 %v783
          %810 = vmatprep.subr.mxu0 0.0
          %811 = vmatpush1.msra.mxu0 %v784
          %812 = vmatprep.subr.mxu0 0.0
          %813 = vmatpush1.msra.mxu0 %v785
          %814 = vmatprep.subr.mxu0 0.0
          %815 = vmatpush1.msra.mxu0 %v786
          %816 = vmatprep.subr.mxu0 0.0
          %817 = vmatpush1.msra.mxu0 %v787
          %818 = vmatprep.subr.mxu0 0.0
          %819 = vmatpush1.msra.mxu0 %v788
          %820 = vmatprep.subr.mxu0 0.0
          %821 = vmatpush1.msra.mxu0 %v789
          %822 = vmatprep.subr.mxu0 0.0
          %823 = vmatpush1.msra.mxu0 %v790
          %824 = vmatprep.subr.mxu0 0.0
          %825 = vmatpush1.msra.mxu0 %v791
          %826 = vmatprep.subr.mxu0 0.0
          %827 = vmatpush1.msra.mxu0 %v792
          %828 = vmatprep.subr.mxu0 0.0
          %829 = vmatpush1.msra.mxu0 %v793
          %830 = vmatprep.subr.mxu0 0.0
          %831 = vmatpush1.msra.mxu0 %v794
          %832 = vmatprep.subr.mxu0 0.0
          %833 = vmatpush1.msra.mxu0 %v795
          %834 = vmatprep.subr.mxu0 0.0
          %835 = vmatpush1.msra.mxu0 %v796
          %836 = vmatprep.subr.mxu0 0.0
          %837 = vmatpush1.msra.mxu0 0.0
          %838 = vmatprep.subr.mxu0 0.0
          %839 = vmatpush1.msra.mxu0 0.0
          %840 = vmatprep.subr.mxu0 0.0
          %841 = vmatpush1.msra.mxu0 0.0
          %842 = vmatprep.subr.mxu0 0.0
          %843 = vmatpush1.msra.mxu0 0.0
          %844 = vmatprep.subr.mxu0 0.0
          %845 = vmatpush1.msra.mxu0 0.0
          %846 = vmatprep.subr.mxu0 0.0
          %847 = vmatpush1.msra.mxu0 0.0
          %848 = vmatprep.subr.mxu0 0.0
          %849 = vmatpush1.msra.mxu0 0.0
          %850 = vmatprep.subr.mxu0 0.0
          %851 = vmatpush1.msra.mxu0 0.0
          %852 = vmatprep.subr.mxu0 0.0
          %853 = vmatpush1.msra.mxu0 0.0
          %854 = vmatprep.subr.mxu0 0.0
          %855 = vmatpush1.msra.mxu0 0.0
          %856 = vmatprep.subr.mxu0 0.0
          %857 = vmatpush1.msra.mxu0 0.0
          %858 = vmatprep.subr.mxu0 0.0
          %859 = vmatpush1.msra.mxu0 0.0
          %860 = vmatprep.subr.mxu0 0.0
          %861 = vmatpush1.msra.mxu0 0.0
          %862 = vmatprep.subr.mxu0 0.0
          %863 = vmatpush1.msra.mxu0 0.0
          %864 = vmatprep.subr.mxu0 0.0
          %865 = vmatpush1.msra.mxu0 0.0
          %866 = vmatprep.subr.mxu0 0.0
          %867 = vmatpush1.msra.mxu0 0.0
          %868 = vmatprep.mubr.f32.mxu0 0.0
          %869 = vmatmul.mubr.f32.gmra.mrb[0].mxu0 %v765
          %v870 = vpop.f32.mrb[0].mxu0
          %v871 = vadd.f32 %v802, %v870
          %v872 = vpop.f32.mrb[0].mxu0
          %873 = vmatprep.mubr.f32.mxu0 0.0
          %874 = vmatmul.mubr.f32.gmra.mrb[0].mxu0 %v766
          %v875 = vpop.f32.mrb[0].mxu0
          %v876 = vadd.f32 %v802, %v875
          %v877 = vpop.f32.mrb[0].mxu0
          %878 = vmatprep.mubr.f32.mxu0 0.0
          %879 = vmatmul.mubr.f32.gmra.mrb[0].mxu0 %v767
          %v880 = vpop.f32.mrb[0].mxu0
          %v881 = vadd.f32 %v802, %v880
          %v882 = vpop.f32.mrb[0].mxu0
          %883 = vmatprep.mubr.f32.mxu0 0.0
          %884 = vmatmul.mubr.f32.gmra.mrb[0].mxu0 %v768
          %v885 = vpop.f32.mrb[0].mxu0
          %v886 = vadd.f32 %v802, %v885
          %v887 = vpop.f32.mrb[0].mxu0
          %888 = vmatprep.mubr.f32.mxu0 0.0
          %889 = vmatmul.mubr.f32.gmra.mrb[0].mxu0 %v769
          %v890 = vpop.f32.mrb[0].mxu0
          %v891 = vadd.f32 %v802, %v890
          %v892 = vpop.f32.mrb[0].mxu0
          %893 = vmatprep.mubr.f32.mxu0 0.0
          %894 = vmatmul.mubr.f32.gmra.mrb[0].mxu0 %v770
          %v895 = vpop.f32.mrb[0].mxu0
          %v896 = vadd.f32 %v802, %v895
          %v897 = vpop.f32.mrb[0].mxu0
          %898 = vmatprep.mubr.f32.mxu0 0.0
          %899 = vmatmul.mubr.f32.gmra.mrb[0].mxu0 %v771
          %v900 = vpop.f32.mrb[0].mxu0
          %v901 = vadd.f32 %v802, %v900
          %v902 = vpop.f32.mrb[0].mxu0
          %903 = vmatprep.mubr.f32.mxu0 0.0
          %904 = vmatmul.mubr.f32.gmra.mrb[0].mxu0 %v772
          %v905 = vpop.f32.mrb[0].mxu0
          %v906 = vadd.f32 %v802, %v905
          %v907 = vpop.f32.mrb[0].mxu0
          %908 = vmatprep.mubr.f32.mxu0 0.0
          %909 = vmatmul.mubr.f32.gmra.mrb[0].mxu0 %v773
          %v910 = vpop.f32.mrb[0].mxu0
          %v911 = vadd.f32 %v802, %v910
          %v912 = vpop.f32.mrb[0].mxu0
          %913 = vmatprep.mubr.f32.mxu0 0.0
          %914 = vmatmul.mubr.f32.gmra.mrb[0].mxu0 %v774
          %v915 = vpop.f32.mrb[0].mxu0
          %v916 = vadd.f32 %v802, %v915
          %v917 = vpop.f32.mrb[0].mxu0
          %918 = vmatprep.mubr.f32.mxu0 0.0
          %919 = vmatmul.mubr.f32.gmra.mrb[0].mxu0 %v775
          %v920 = vpop.f32.mrb[0].mxu0
          %v921 = vadd.f32 %v802, %v920
          %v922 = vpop.f32.mrb[0].mxu0
          %923 = vmatprep.mubr.f32.mxu0 0.0
          %924 = vmatmul.mubr.f32.gmra.mrb[0].mxu0 %v776
          %v925 = vpop.f32.mrb[0].mxu0
          %v926 = vadd.f32 %v802, %v925
          %v927 = vpop.f32.mrb[0].mxu0
          %928 = vmatprep.mubr.f32.mxu0 0.0
          %929 = vmatmul.mubr.f32.gmra.mrb[0].mxu0 %v777
          %v930 = vpop.f32.mrb[0].mxu0
          %v931 = vadd.f32 %v802, %v930
          %v932 = vpop.f32.mrb[0].mxu0
          %933 = vmatprep.mubr.f32.mxu0 0.0
          %934 = vmatmul.mubr.f32.gmra.mrb[0].mxu0 %v778
          %v935 = vpop.f32.mrb[0].mxu0
          %v936 = vadd.f32 %v802, %v935
          %v937 = vpop.f32.mrb[0].mxu0
          %938 = vmatprep.mubr.f32.mxu0 0.0
          %939 = vmatmul.mubr.f32.gmra.mrb[0].mxu0 %v779
          %v940 = vpop.f32.mrb[0].mxu0
          %v941 = vadd.f32 %v802, %v940
          %v942 = vpop.f32.mrb[0].mxu0
          %943 = vmatprep.mubr.f32.mxu0 0.0
          %944 = vmatmul.mubr.f32.gmra.mrb[0].mxu0 %v780
          %v945 = vpop.f32.mrb[0].mxu0
          %v946 = vadd.f32 %v802, %v945
          %v947 = vpop.f32.mrb[0].mxu0
          %948 = vdwg.mxu0
          %949 = vst [vmem:[%s359] sm:$0xff] %v871
          %950 = vst [vmem:[%s359 + $0x8] sm:$0xff] %v876
          %951 = vst [vmem:[%s359 + $0x10] sm:$0xff] %v881
          %952 = vst [vmem:[%s359 + $0x18] sm:$0xff] %v886
          %953 = vst [vmem:[%s359 + $0x20] sm:$0xff] %v891
          %954 = vst [vmem:[%s359 + $0x28] sm:$0xff] %v896
          %955 = vst [vmem:[%s359 + $0x30] sm:$0xff] %v901
          %956 = vst [vmem:[%s359 + $0x38] sm:$0xff] %v906
          %957 = vst [vmem:[%s359 + $0x40] sm:$0xff] %v911
          %958 = vst [vmem:[%s359 + $0x48] sm:$0xff] %v916
          %959 = vst [vmem:[%s359 + $0x50] sm:$0xff] %v921
          %960 = vst [vmem:[%s359 + $0x58] sm:$0xff] %v926
          %961 = vst [vmem:[%s359 + $0x60] sm:$0xff] %v931
          %962 = vst [vmem:[%s359 + $0x68] sm:$0xff] %v936
          %963 = vst [vmem:[%s359 + $0x70] sm:$0xff] %v941
          %964 = vst [vmem:[%s359 + $0x78] sm:$0xff] %v946
        $region90: #{gcl_forward.3} parent=77 // pred_fallthru
          _
        %s965 = smul.u32 16, %s21
        %p966 = scmp.lt.s32.totalorder %s965, 31
        %s967 = scalar_select %p966, %s965, 31
        %s968 = smul.addr %s967, 8
        %s969 = scalar_lea.vmem %s6, %s968
        // Predicated region
        $region91: #{gcl_forward.3} parent=77 // pred_check
          %p970 = pneg %p190
        $region92: #{gcl_forward.3} parent=77 // pred_check_branch
          %972 = sbr.rel (%p970) target = $region94
        $region93: #{gcl_forward.3} parent=77 // pred_region
          %s973 = smul.u32 16, %s21
        $region94: #{gcl_forward.3} parent=77 // pred_fallthru
          _
      $region78: #{gcl_forward.3} parent=5 // pred_fallthru
        _
      %p974 = scmp.le.s32.totalorder 2, %s12
      // Predicated region
      $region95: #{gcl_forward.3} parent=5 // pred_check
        %p975 = pneg %p974
      $region96: #{gcl_forward.3} parent=5 // pred_check_branch
        %977 = sbr.rel (%p975) target = $region98
      $region97: #{gcl_forward.3} parent=5 // pred_region
        %s978 = ssub.s32 %s12, 2
        // Predicated region
        $region99: #{gcl_forward.3} parent=97 // pred_check
          %p979 = pneg %p196
        $region100: #{gcl_forward.3} parent=97 // pred_check_branch
          %981 = sbr.rel (%p979) target = $region102
        $region101: #{gcl_forward.3} parent=97 // pred_region
          %s982 = smul.u32 16, %s23
          %p983 = scmp.lt.s32.totalorder %s982, 31
          %s984 = scalar_select %p983, %s982, 31
          %s985 = smul.addr %s984, 8
          %s986 = scalar_lea.vmem %s6, %s985
        $region102: #{gcl_forward.3} parent=97 // pred_fallthru
          _
      $region98: #{gcl_forward.3} parent=5 // pred_fallthru
        _
    $region6: #{gcl_forward.3} parent=1 // loop_footer
      %s16 = sadd.s32 1, %s12
    $region7: #{gcl_forward.3} parent=1 // loop_footer_branch
      %11 = sbr.rel target = $region3
    $region8: #{gcl_forward.3} parent=1 // loop_exit
      _

// kernel: gcl_forward.2
$region0: #{gcl_forward.2}
  #allocation0 [shape = 'u32[]', space=smem, size = 0x4, offset = 0x4, fixed_abs, tag = 'smem constant byte address 0x4 - core index']
  #allocation1 [shape = 'u32[144,128]{1,0:T(1,128)}', space=vmem, size = 0x12000, scoped, tag = 'internal scratch']
  #allocation2 [shape = 'f32[128,128]{1,0:T(8,128)}', space=vmem, size = 0x10000, scoped, tag = 'scratch operand']
  %s0 = inlined_call_operand.vmem [shape: s8[256,256], index: 0, kind: input, shape index: {}]
  %s1 = inlined_call_operand.vmem [shape: f32[256,128], index: 1, kind: input, shape index: {}]
  %s2 = inlined_call_operand.vmem [shape: f32[256,1], index: 2, kind: input, shape index: {}]
  %s3 = inlined_call_operand.vmem [shape: f32[128,128], index: 3, kind: input, shape index: {}]
  %s4 = inlined_call_operand.vmem [shape: f32[1,128], index: 4, kind: input, shape index: {}]
  %s5 = inlined_call_operand.vmem [shape: f32[128,128], index: 5, kind: input, shape index: {}]
  %s6 = inlined_call_operand.vmem [shape: f32[256,128], index: 6, kind: output, shape index: {}]
  %s7 = sld [smem:[#allocation0]]
  $region103: #{gcl_forward.2} parent=0
    _
  %s9 = ssub.s32 1, %s7
  %s10 = scalar_select 0, %s9, %s7
  $region1: #{gcl_forward.2} parent=0
    #allocation3 [shape = 'u8[32768]{0}', space=vmem, size = 0x8000, scoped, tag = 'input window, operand 0']
    loop: start=0, step=1, limit=6
    $region2: #{gcl_forward.2} parent=1 // loop_pre_header
      _
    $region3: #{gcl_forward.2} parent=1 // loop_header
      %s12 = sphi 0, %s16
      %p13 = scmp.ge.s32.totalorder %s12, 6
      %s19 = sphi 0, %s31
      %s20 = sphi 0, %s27
      %s21 = sphi 0, %s19
      %s22 = sphi 0, %s20
      %s23 = sphi 0, %s21
      %s24 = sphi 0, %s22
      %s36 = sphi 0, %s38
      %s39 = sphi 0, %s36
      %s40 = sphi 0, %s39
      %s56 = sphi 0, %s40
      %s62 = sphi 0, %s64
      %s65 = sphi 0, %s62
      %s66 = sphi 0, %s65
      %s82 = sphi 0, %s66
      %s88 = sphi 0, %s90
      %s91 = sphi 0, %s88
      %s92 = sphi 0, %s91
      %s108 = sphi 0, %s92
      %s112 = sphi 0, %s112
      %s114 = sphi 0, %s112
      %s115 = sphi 0, %s114
      %s129 = sphi 0, %s115
      %s133 = sphi 0, %s133
      %s135 = sphi 0, %s133
      %s136 = sphi 0, %s135
      %s150 = sphi 0, %s136
      %s154 = sphi 0, %s154
      %s156 = sphi 0, %s154
      %s157 = sphi 0, %s156
      %s171 = sphi 0, %s157
      %s177 = sphi 0, %s179
      %s180 = sphi 0, %s177
      %s181 = sphi 0, %s180
      %s197 = sphi 0, %s181
    $region4: #{gcl_forward.2} parent=1 // loop_header_branch
      %15 = sbr.rel (%p13) target = $region8
    $region5: #{gcl_forward.2} parent=1 // loop_body
      %s17 = ssub.s32 %s12, 1
      %s18 = ssub.s32 %s12, 2
      %s25 = sadd.s32 1, %s20
      %p26 = scmp.ge.s32.totalorder %s25, 2
      %s27 = scalar_select %p26, 0, %s25
      %s28 = sadd.s32 1, %s19
      %s29 = scalar_select %p26, %s28, %s19
      %p30 = scmp.ge.s32.totalorder %s29, 2
      %s31 = scalar_select %p30, 0, %s29
      %s32 = ssub.s32 %s19, %s31
      %s33 = ssub.s32 %s20, %s27
      %s34 = sor.u32 %s32, %s33
      %p35 = scmp.eq.s32.totalorder %s34, 0
      %s37 = sadd.s32 %s36, 1
      %s38 = scalar_select %p35, %s36, %s37
      %p41 = pneg %p35
      %p42 = scmp.eq.s32.totalorder %s12, 3
      %p43 = por %p41, %p42
      %p44 = scmp.ne.s32.totalorder %s36, %s39
      %p45 = scmp.eq.s32.totalorder %s12, 0
      %p46 = por %p44, %p45
      %p47 = scmp.ne.s32.totalorder %s36, %s39
      %p48 = scmp.eq.s32.totalorder %s17, 3
      %p49 = por %p47, %p48
      %p50 = scmp.ne.s32.totalorder %s39, %s40
      %p51 = scmp.eq.s32.totalorder %s17, 0
      %p52 = por %p50, %p51
      %p53 = scmp.ne.s32.totalorder %s39, %s40
      %p54 = scmp.eq.s32.totalorder %s18, 3
      %p55 = por %p53, %p54
      %p57 = scmp.ne.s32.totalorder %s40, %s56
      %p58 = scmp.eq.s32.totalorder %s18, 0
      %p59 = por %p57, %p58
      %s60 = ssub.s32 %s20, %s27
      %p61 = scmp.eq.s32.totalorder %s60, 0
      %s63 = sadd.s32 %s62, 1
      %s64 = scalar_select %p61, %s62, %s63
      %p67 = pneg %p61
      %p68 = scmp.eq.s32.totalorder %s12, 3
      %p69 = por %p67, %p68
      %p70 = scmp.ne.s32.totalorder %s62, %s65
      %p71 = scmp.eq.s32.totalorder %s12, 0
      %p72 = por %p70, %p71
      %p73 = scmp.ne.s32.totalorder %s62, %s65
      %p74 = scmp.eq.s32.totalorder %s17, 3
      %p75 = por %p73, %p74
      %p76 = scmp.ne.s32.totalorder %s65, %s66
      %p77 = scmp.eq.s32.totalorder %s17, 0
      %p78 = por %p76, %p77
      %p79 = scmp.ne.s32.totalorder %s65, %s66
      %p80 = scmp.eq.s32.totalorder %s18, 3
      %p81 = por %p79, %p80
      %p83 = scmp.ne.s32.totalorder %s66, %s82
      %p84 = scmp.eq.s32.totalorder %s18, 0
      %p85 = por %p83, %p84
      %s86 = ssub.s32 %s19, %s31
      %p87 = scmp.eq.s32.totalorder %s86, 0
      %s89 = sadd.s32 %s88, 1
      %s90 = scalar_select %p87, %s88, %s89
      %p93 = pneg %p87
      %p94 = scmp.eq.s32.totalorder %s12, 3
      %p95 = por %p93, %p94
      %p96 = scmp.ne.s32.totalorder %s88, %s91
      %p97 = scmp.eq.s32.totalorder %s12, 0
      %p98 = por %p96, %p97
      %p99 = scmp.ne.s32.totalorder %s88, %s91
      %p100 = scmp.eq.s32.totalorder %s17, 3
      %p101 = por %p99, %p100
      %p102 = scmp.ne.s32.totalorder %s91, %s92
      %p103 = scmp.eq.s32.totalorder %s17, 0
      %p104 = por %p102, %p103
      %p105 = scmp.ne.s32.totalorder %s91, %s92
      %p106 = scmp.eq.s32.totalorder %s18, 3
      %p107 = por %p105, %p106
      %p109 = scmp.ne.s32.totalorder %s92, %s108
      %p110 = scmp.eq.s32.totalorder %s18, 0
      %p111 = por %p109, %p110
      %s113 = sadd.s32 %s112, 1
      %p116 = scmp.eq.s32.totalorder %s12, 3
      %p117 = scmp.ne.s32.totalorder %s112, %s114
      %p118 = scmp.eq.s32.totalorder %s12, 0
      %p119 = por %p117, %p118
      %p120 = scmp.ne.s32.totalorder %s112, %s114
      %p121 = scmp.eq.s32.totalorder %s17, 3
      %p122 = por %p120, %p121
      %p123 = scmp.ne.s32.totalorder %s114, %s115
      %p124 = scmp.eq.s32.totalorder %s17, 0
      %p125 = por %p123, %p124
      %p126 = scmp.ne.s32.totalorder %s114, %s115
      %p127 = scmp.eq.s32.totalorder %s18, 3
      %p128 = por %p126, %p127
      %p130 = scmp.ne.s32.totalorder %s115, %s129
      %p131 = scmp.eq.s32.totalorder %s18, 0
      %p132 = por %p130, %p131
      %s134 = sadd.s32 %s133, 1
      %p137 = scmp.eq.s32.totalorder %s12, 3
      %p138 = scmp.ne.s32.totalorder %s133, %s135
      %p139 = scmp.eq.s32.totalorder %s12, 0
      %p140 = por %p138, %p139
      %p141 = scmp.ne.s32.totalorder %s133, %s135
      %p142 = scmp.eq.s32.totalorder %s17, 3
      %p143 = por %p141, %p142
      %p144 = scmp.ne.s32.totalorder %s135, %s136
      %p145 = scmp.eq.s32.totalorder %s17, 0
      %p146 = por %p144, %p145
      %p147 = scmp.ne.s32.totalorder %s135, %s136
      %p148 = scmp.eq.s32.totalorder %s18, 3
      %p149 = por %p147, %p148
      %p151 = scmp.ne.s32.totalorder %s136, %s150
      %p152 = scmp.eq.s32.totalorder %s18, 0
      %p153 = por %p151, %p152
      %s155 = sadd.s32 %s154, 1
      %p158 = scmp.eq.s32.totalorder %s12, 3
      %p159 = scmp.ne.s32.totalorder %s154, %s156
      %p160 = scmp.eq.s32.totalorder %s12, 0
      %p161 = por %p159, %p160
      %p162 = scmp.ne.s32.totalorder %s154, %s156
      %p163 = scmp.eq.s32.totalorder %s17, 3
      %p164 = por %p162, %p163
      %p165 = scmp.ne.s32.totalorder %s156, %s157
      %p166 = scmp.eq.s32.totalorder %s17, 0
      %p167 = por %p165, %p166
      %p168 = scmp.ne.s32.totalorder %s156, %s157
      %p169 = scmp.eq.s32.totalorder %s18, 3
      %p170 = por %p168, %p169
      %p172 = scmp.ne.s32.totalorder %s157, %s171
      %p173 = scmp.eq.s32.totalorder %s18, 0
      %p174 = por %p172, %p173
      %s175 = ssub.s32 %s19, %s31
      %p176 = scmp.eq.s32.totalorder %s175, 0
      %s178 = sadd.s32 %s177, 1
      %s179 = scalar_select %p176, %s177, %s178
      %p182 = pneg %p176
      %p183 = scmp.eq.s32.totalorder %s12, 3
      %p184 = por %p182, %p183
      %p185 = scmp.ne.s32.totalorder %s177, %s180
      %p186 = scmp.eq.s32.totalorder %s12, 0
      %p187 = por %p185, %p186
      %p188 = scmp.ne.s32.totalorder %s177, %s180
      %p189 = scmp.eq.s32.totalorder %s17, 3
      %p190 = por %p188, %p189
      %p191 = scmp.ne.s32.totalorder %s180, %s181
      %p192 = scmp.eq.s32.totalorder %s17, 0
      %p193 = por %p191, %p192
      %p194 = scmp.ne.s32.totalorder %s180, %s181
      %p195 = scmp.eq.s32.totalorder %s18, 3
      %p196 = por %p194, %p195
      %p198 = scmp.ne.s32.totalorder %s181, %s197
      %p199 = scmp.eq.s32.totalorder %s18, 0
      %p200 = por %p198, %p199
      %p201 = scmp.le.s32.totalorder 1, %s12
      %p202 = scmp.lt.s32.totalorder %s12, 5
      %p203 = pnand %p201, %p202
      %p204 = pneg %p203
      // Predicated region
      $region9: #{gcl_forward.2} parent=5 // pred_check
        _
      $region10: #{gcl_forward.2} parent=5 // pred_check_branch
        %206 = sbr.rel (%p203) target = $region12
      $region11: #{gcl_forward.2} parent=5 // pred_region
        %s207 = ssub.s32 %s12, 1
        // Predicated region
        $region13: #{gcl_forward.2} parent=11 // pred_check
          %p208 = pneg %p125
        $region14: #{gcl_forward.2} parent=11 // pred_check_branch
          %210 = sbr.rel (%p208) target = $region16
        $region15: #{gcl_forward.2} parent=11 // pred_region
          _
        $region16: #{gcl_forward.2} parent=11 // pred_fallthru
          _
        // Predicated region
        $region17: #{gcl_forward.2} parent=11 // pred_check
          %p211 = pneg %p146
        $region18: #{gcl_forward.2} parent=11 // pred_check_branch
          %213 = sbr.rel (%p211) target = $region20
        $region19: #{gcl_forward.2} parent=11 // pred_region
          _
        $region20: #{gcl_forward.2} parent=11 // pred_fallthru
          _
        // Predicated region
        $region21: #{gcl_forward.2} parent=11 // pred_check
          %p214 = pneg %p167
        $region22: #{gcl_forward.2} parent=11 // pred_check_branch
          %216 = sbr.rel (%p214) target = $region24
        $region23: #{gcl_forward.2} parent=11 // pred_region
          _
        $region24: #{gcl_forward.2} parent=11 // pred_fallthru
          _
      $region12: #{gcl_forward.2} parent=5 // pred_fallthru
        _
      %p217 = scmp.lt.s32.totalorder %s12, 4
      // Predicated region
      $region25: #{gcl_forward.2} parent=5 // pred_check
        %p218 = pneg %p217
      $region26: #{gcl_forward.2} parent=5 // pred_check_branch
        %220 = sbr.rel (%p218) target = $region28
      $region27: #{gcl_forward.2} parent=5 // pred_region
        // Predicated region
        $region29: #{gcl_forward.2} parent=27 // pred_check
          %p221 = pneg %p46
        $region30: #{gcl_forward.2} parent=27 // pred_check_branch
          %223 = sbr.rel (%p221) target = $region32
        $region31: #{gcl_forward.2} parent=27 // pred_region
          %s224 = sand.u32 %s36, 1
          %s225 = sand.u32 %s36, 1
          %s226 = smul.addr %s225, 32
          %s227 = scalar_lea.vmem [#allocation3], %s226
          %s228 = smul.u32 4, %s19
          %s229 = smul.addr %s228, 2
          %s230 = sadd.s32 %s20, %s229
          %s231 = smul.addr %s230, 8
          %s232 = scalar_lea.vmem %s0, %s231
          // Predicated region
          $region33: #{gcl_forward.2} parent=31 // pred_check
            _
          $region34: #{gcl_forward.2} parent=31 // pred_check_branch
            %234 = sbr.rel (0) target = $region36
          $region35: #{gcl_forward.2} parent=31 // pred_region
            // Predicated region
            $region37: #{gcl_forward.2} parent=35 // pred_check
              _
            $region38: #{gcl_forward.2} parent=35 // pred_check_branch
              %236 = sbr.rel (0) target = $region40
            $region39: #{gcl_forward.2} parent=35 // pred_region
              // Predicated region
              $region52: #{gcl_forward.2} parent=39 // pred_check
                _
              $region53: #{gcl_forward.2} parent=39 // pred_check_branch
                %257 = sbr.rel (0) target = $region55
              $region54: #{gcl_forward.2} parent=39 // pred_region
                loop: start=0, step=1, limit=1
                $region56: #{gcl_forward.2} parent=54 // loop_pre_header
                  _
                $region57: #{gcl_forward.2} parent=54 // loop_header
                  %s259 = sphi 0, %s263
                  %p260 = scmp.ge.s32.totalorder %s259, 1
                  %s264 = sphi %s232, %s232
                  %s265 = sphi %s227, %s227
                $region58: #{gcl_forward.2} parent=54 // loop_header_branch
                  %262 = sbr.rel (%p260) target = $region62
                $region59: #{gcl_forward.2} parent=54 // loop_body
                  %v266 = vld [vmem:[%s264] sm:$0xff]
                  %267 = vst [vmem:[%s265] sm:$0xff] %v266
                  %v268 = vld [vmem:[%s264 + $0x10] sm:$0xff]
                  %269 = vst [vmem:[%s265 + $0x8] sm:$0xff] %v268
                  %v270 = vld [vmem:[%s264 + $0x20] sm:$0xff]
                  %271 = vst [vmem:[%s265 + $0x10] sm:$0xff] %v270
                  %v272 = vld [vmem:[%s264 + $0x30] sm:$0xff]
                  %273 = vst [vmem:[%s265 + $0x18] sm:$0xff] %v272
                $region60: #{gcl_forward.2} parent=54 // loop_footer
                  %s263 = sadd.s32 1, %s259
                $region61: #{gcl_forward.2} parent=54 // loop_footer_branch
                  %258 = sbr.rel target = $region57
                $region62: #{gcl_forward.2} parent=54 // loop_exit
                  _
              $region55: #{gcl_forward.2} parent=39 // pred_fallthru
                _
              // Predicated region
              $region63: #{gcl_forward.2} parent=39 // pred_check
                _
              $region64: #{gcl_forward.2} parent=39 // pred_check_branch
                %275 = sbr.rel target = $region66
              $region65: #{gcl_forward.2} parent=39 // pred_region
                _
              $region66: #{gcl_forward.2} parent=39 // pred_fallthru
                _
            $region40: #{gcl_forward.2} parent=35 // pred_fallthru
              _
            // Predicated region
            $region41: #{gcl_forward.2} parent=35 // pred_check
              _
            $region42: #{gcl_forward.2} parent=35 // pred_check_branch
              %238 = sbr.rel target = $region44
            $region43: #{gcl_forward.2} parent=35 // pred_region
              loop: start=0, step=1, limit=1
              $region45: #{gcl_forward.2} parent=43 // loop_pre_header
                _
              $region46: #{gcl_forward.2} parent=43 // loop_header
                %s241 = sphi 0, %s245
                %p242 = scmp.ge.s32.totalorder %s241, 1
                %s246 = sphi %s232, %s232
                %s247 = sphi %s227, %s227
              $region47: #{gcl_forward.2} parent=43 // loop_header_branch
                %244 = sbr.rel (%p242) target = $region51
              $region48: #{gcl_forward.2} parent=43 // loop_body
                %v248 = vld [vmem:[%s246] sm:$0xff]
                %249 = vst [vmem:[%s247] sm:$0xff] %v248
                %v250 = vld [vmem:[%s246 + $0x10] sm:$0xff]
                %251 = vst [vmem:[%s247 + $0x8] sm:$0xff] %v250
                %v252 = vld [vmem:[%s246 + $0x20] sm:$0xff]
                %253 = vst [vmem:[%s247 + $0x10] sm:$0xff] %v252
                %v254 = vld [vmem:[%s246 + $0x30] sm:$0xff]
                %255 = vst [vmem:[%s247 + $0x18] sm:$0xff] %v254
              $region49: #{gcl_forward.2} parent=43 // loop_footer
                %s245 = sadd.s32 1, %s241
              $region50: #{gcl_forward.2} parent=43 // loop_footer_branch
                %240 = sbr.rel target = $region46
              $region51: #{gcl_forward.2} parent=43 // loop_exit
                _
            $region44: #{gcl_forward.2} parent=35 // pred_fallthru
              _
          $region36: #{gcl_forward.2} parent=31 // pred_fallthru
            _
          %276 = vnop
        $region32: #{gcl_forward.2} parent=27 // pred_fallthru
          _
        // Predicated region
        $region67: #{gcl_forward.2} parent=27 // pred_check
          %p277 = pneg %p72
        $region68: #{gcl_forward.2} parent=27 // pred_check_branch
          %279 = sbr.rel (%p277) target = $region70
        $region69: #{gcl_forward.2} parent=27 // pred_region
          %s280 = smul.u32 16, %s20
          %p281 = scmp.lt.s32.totalorder %s280, 31
          %s282 = scalar_select %p281, %s280, 31
          %s283 = smul.addr %s282, 8
          %s284 = scalar_lea.vmem %s1, %s283
          %s285 = smul.u32 16, %s20
        $region70: #{gcl_forward.2} parent=27 // pred_fallthru
          _
        // Predicated region
        $region71: #{gcl_forward.2} parent=27 // pred_check
          %p286 = pneg %p98
        $region72: #{gcl_forward.2} parent=27 // pred_check_branch
          %288 = sbr.rel (%p286) target = $region74
        $region73: #{gcl_forward.2} parent=27 // pred_region
          %s289 = smul.u32 16, %s19
          %p290 = scmp.lt.s32.totalorder %s289, 31
          %s291 = scalar_select %p290, %s289, 31
          %s292 = smul.addr %s291, 8
          %s293 = scalar_lea.vmem %s2, %s292
          %s294 = smul.u32 16, %s19
        $region74: #{gcl_forward.2} parent=27 // pred_fallthru
          _
      $region28: #{gcl_forward.2} parent=5 // pred_fallthru
        _
      %p295 = scmp.le.s32.totalorder 1, %s12
      %p296 = scmp.lt.s32.totalorder %s12, 5
      %p297 = pnand %p295, %p296
      %p298 = pneg %p297
      // Predicated region
      $region75: #{gcl_forward.2} parent=5 // pred_check
        _
      $region76: #{gcl_forward.2} parent=5 // pred_check_branch
        %300 = sbr.rel (%p297) target = $region78
      $region77: #{gcl_forward.2} parent=5 // pred_region
        %s301 = ssub.s32 %s12, 1
        %s302 = sand.u32 %s39, 1
        %s303 = sand.u32 %s39, 1
        %s304 = smul.addr %s303, 32
        %s305 = scalar_lea.vmem [#allocation3], %s304
        // Predicated region
        $region79: #{gcl_forward.2} parent=77 // pred_check
          %p306 = pneg %p52
        $region80: #{gcl_forward.2} parent=77 // pred_check_branch
          %308 = sbr.rel (%p306) target = $region82
        $region81: #{gcl_forward.2} parent=77 // pred_region
          _
        $region82: #{gcl_forward.2} parent=77 // pred_fallthru
          _
        %s309 = sand.u32 %s39, 1
        %s310 = sand.u32 %s39, 1
        %s311 = smul.addr %s310, 32
        %s312 = scalar_lea.vmem [#allocation3], %s311
        %p313 = pneg %p52
        %p314 = pneg %p49
        %s315 = smul.u32 16, %s22
        %p316 = scmp.lt.s32.totalorder %s315, 31
        %s317 = scalar_select %p316, %s315, 31
        %s318 = smul.addr %s317, 8
        %s319 = scalar_lea.vmem %s1, %s318
        %p320 = pneg %p78
        %p321 = pneg %p75
        %s322 = smul.u32 16, %s21
        %p323 = scmp.lt.s32.totalorder %s322, 31
        %s324 = scalar_select %p323, %s322, 31
        %s325 = smul.addr %s324, 8
        %s326 = scalar_lea.vmem %s2, %s325
        %p327 = pneg %p104
        %p328 = pneg %p101
        %p329 = pneg %p125
        %p330 = pneg %p122
        %p331 = pneg %p146
        %p332 = pneg %p143
        %p333 = pneg %p167
        %p334 = pneg %p164
        %p335 = pneg %p193
        %p336 = pneg %p190
        %s337 = smul.u32 16, %s21
        %p338 = scmp.lt.s32.totalorder %s337, 31
        %s339 = scalar_select %p338, %s337, 31
        %s340 = smul.addr %s339, 8
        %s341 = scalar_lea.vmem %s6, %s340
        %s342 = smul.u32 4, %s21
        %s343 = smul.u32 16, %s22
        %p344 = scmp.lt.s32.totalorder %s343, 31
        %s345 = scalar_select %p344, %s343, 31
        %s346 = smul.addr %s345, 8
        %s347 = scalar_lea.vmem %s1, %s346
        %s348 = smul.u32 16, %s22
        %s349 = smul.u32 16, %s21
        %p350 = scmp.lt.s32.totalorder %s349, 31
        %s351 = scalar_select %p350, %s349, 31
        %s352 = smul.addr %s351, 8
        %s353 = scalar_lea.vmem %s2, %s352
        %s354 = smul.u32 16, %s21
        %s355 = smul.u32 16, %s21
        %p356 = scmp.lt.s32.totalorder %s355, 31
        %s357 = scalar_select %p356, %s355, 31
        %s358 = smul.addr %s357, 8
        %s359 = scalar_lea.vmem %s6, %s358
        %s360 = smul.u32 16, %s21
        %p361 = scmp.eq.s32.totalorder %s22, 0
        // Predicated region
        $region83: #{gcl_forward.2} parent=77 // pred_check
          %p362 = pneg %p361
        $region84: #{gcl_forward.2} parent=77 // pred_check_branch
          %364 = sbr.rel (%p362) target = $region86
        $region85: #{gcl_forward.2} parent=77 // pred_region
          %365 = vst [vmem:[#allocation2] sm:$0xff] 0.0
          %366 = vst [vmem:[#allocation2 + $0x8] sm:$0xff] 0.0
          %367 = vst [vmem:[#allocation2 + $0x10] sm:$0xff] 0.0
          %368 = vst [vmem:[#allocation2 + $0x18] sm:$0xff] 0.0
          %369 = vst [vmem:[#allocation2 + $0x20] sm:$0xff] 0.0
          %370 = vst [vmem:[#allocation2 + $0x28] sm:$0xff] 0.0
          %371 = vst [vmem:[#allocation2 + $0x30] sm:$0xff] 0.0
          %372 = vst [vmem:[#allocation2 + $0x38] sm:$0xff] 0.0
          %373 = vst [vmem:[#allocation2 + $0x40] sm:$0xff] 0.0
          %374 = vst [vmem:[#allocation2 + $0x48] sm:$0xff] 0.0
          %375 = vst [vmem:[#allocation2 + $0x50] sm:$0xff] 0.0
          %376 = vst [vmem:[#allocation2 + $0x58] sm:$0xff] 0.0
          %377 = vst [vmem:[#allocation2 + $0x60] sm:$0xff] 0.0
          %378 = vst [vmem:[#allocation2 + $0x68] sm:$0xff] 0.0
          %379 = vst [vmem:[#allocation2 + $0x70] sm:$0xff] 0.0
          %380 = vst [vmem:[#allocation2 + $0x78] sm:$0xff] 0.0
        $region86: #{gcl_forward.2} parent=77 // pred_fallthru
          _
        %v381 = vld [vmem:[#allocation2] sm:$0xff]
        %v382 = vld [vmem:[#allocation2 + $0x8] sm:$0xff]
        %v383 = vld [vmem:[#allocation2 + $0x10] sm:$0xff]
        %v384 = vld [vmem:[#allocation2 + $0x18] sm:$0xff]
        %v385 = vld [vmem:[#allocation2 + $0x20] sm:$0xff]
        %v386 = vld [vmem:[#allocation2 + $0x28] sm:$0xff]
        %v387 = vld [vmem:[#allocation2 + $0x30] sm:$0xff]
        %v388 = vld [vmem:[#allocation2 + $0x38] sm:$0xff]
        %v389 = vld [vmem:[#allocation2 + $0x40] sm:$0xff]
        %v390 = vld [vmem:[#allocation2 + $0x48] sm:$0xff]
        %v391 = vld [vmem:[#allocation2 + $0x50] sm:$0xff]
        %v392 = vld [vmem:[#allocation2 + $0x58] sm:$0xff]
        %v393 = vld [vmem:[#allocation2 + $0x60] sm:$0xff]
        %v394 = vld [vmem:[#allocation2 + $0x68] sm:$0xff]
        %v395 = vld [vmem:[#allocation2 + $0x70] sm:$0xff]
        %v396 = vld [vmem:[#allocation2 + $0x78] sm:$0xff]
        %v397 = vld [vmem:[%s305] sm:$0xff]
        %v398 = vld [vmem:[%s305 + $0x8] sm:$0xff]
        %v399 = vld [vmem:[%s305 + $0x10] sm:$0xff]
        %v400 = vld [vmem:[%s305 + $0x18] sm:$0xff]
        %v401 = vunpack.c.0.s8 %v397
        %v402 = vunpack.c.1.s8 %v397
        %v403 = vunpack.c.2.s8 %v397
        %v404 = vunpack.c.3.s8 %v397
        %v405 = vunpack.c.0.s8 %v398
        %v406 = vunpack.c.1.s8 %v398
        %v407 = vunpack.c.2.s8 %v398
        %v408 = vunpack.c.3.s8 %v398
        %v409 = vunpack.c.0.s8 %v399
        %v410 = vunpack.c.1.s8 %v399
        %v411 = vunpack.c.2.s8 %v399
        %v412 = vunpack.c.3.s8 %v399
        %v413 = vunpack.c.0.s8 %v400
        %v414 = vunpack.c.1.s8 %v400
        %v415 = vunpack.c.2.s8 %v400
        %v416 = vunpack.c.3.s8 %v400
        %v417 = vcvt.s32.f32 %v401
        %v418 = vcvt.s32.f32 %v402
        %v419 = vcvt.s32.f32 %v403
        %v420 = vcvt.s32.f32 %v404
        %v421 = vcvt.s32.f32 %v405
        %v422 = vcvt.s32.f32 %v406
        %v423 = vcvt.s32.f32 %v407
        %v424 = vcvt.s32.f32 %v408
        %v425 = vcvt.s32.f32 %v409
        %v426 = vcvt.s32.f32 %v410
        %v427 = vcvt.s32.f32 %v411
        %v428 = vcvt.s32.f32 %v412
        %v429 = vcvt.s32.f32 %v413
        %v430 = vcvt.s32.f32 %v414
        %v431 = vcvt.s32.f32 %v415
        %v432 = vcvt.s32.f32 %v416
        %v433 = vld [vmem:[%s347] sm:$0xff]
        %v434 = vld [vmem:[%s347 + $0x8] sm:$0xff]
        %v435 = vld [vmem:[%s347 + $0x10] sm:$0xff]
        %v436 = vld [vmem:[%s347 + $0x18] sm:$0xff]
        %v437 = vld [vmem:[%s347 + $0x20] sm:$0xff]
        %v438 = vld [vmem:[%s347 + $0x28] sm:$0xff]
        %v439 = vld [vmem:[%s347 + $0x30] sm:$0xff]
        %v440 = vld [vmem:[%s347 + $0x38] sm:$0xff]
        %v441 = vld [vmem:[%s347 + $0x40] sm:$0xff]
        %v442 = vld [vmem:[%s347 + $0x48] sm:$0xff]
        %v443 = vld [vmem:[%s347 + $0x50] sm:$0xff]
        %v444 = vld [vmem:[%s347 + $0x58] sm:$0xff]
        %v445 = vld [vmem:[%s347 + $0x60] sm:$0xff]
        %v446 = vld [vmem:[%s347 + $0x68] sm:$0xff]
        %v447 = vld [vmem:[%s347 + $0x70] sm:$0xff]
        %v448 = vld [vmem:[%s347 + $0x78] sm:$0xff]
        %449 = vmatprep.subr.mxu0 0.0
        %450 = vmatpush1.msra.mxu0 %v433
        %451 = vmatprep.subr.mxu0 0.0
        %452 = vmatpush1.msra.mxu0 %v434
        %453 = vmatprep.subr.mxu0 0.0
        %454 = vmatpush1.msra.mxu0 %v435
        %455 = vmatprep.subr.mxu0 0.0
        %456 = vmatpush1.msra.mxu0 %v436
        %457 = vmatprep.subr.mxu0 0.0
        %458 = vmatpush1.msra.mxu0 %v437
        %459 = vmatprep.subr.mxu0 0.0
        %460 = vmatpush1.msra.mxu0 %v438
        %461 = vmatprep.subr.mxu0 0.0
        %462 = vmatpush1.msra.mxu0 %v439
        %463 = vmatprep.subr.mxu0 0.0
        %464 = vmatpush1.msra.mxu0 %v440
        %465 = vmatprep.subr.mxu0 0.0
        %466 = vmatpush1.msra.mxu0 %v441
        %467 = vmatprep.subr.mxu0 0.0
        %468 = vmatpush1.msra.mxu0 %v442
        %469 = vmatprep.subr.mxu0 0.0
        %470 = vmatpush1.msra.mxu0 %v443
        %471 = vmatprep.subr.mxu0 0.0
        %472 = vmatpush1.msra.mxu0 %v444
        %473 = vmatprep.subr.mxu0 0.0
        %474 = vmatpush1.msra.mxu0 %v445
        %475 = vmatprep.subr.mxu0 0.0
        %476 = vmatpush1.msra.mxu0 %v446
        %477 = vmatprep.subr.mxu0 0.0
        %478 = vmatpush1.msra.mxu0 %v447
        %479 = vmatprep.subr.mxu0 0.0
        %480 = vmatpush1.msra.mxu0 %v448
        %481 = vmatprep.subr.mxu0 0.0
        %482 = vmatpush1.msra.mxu0 0.0
        %483 = vmatprep.subr.mxu0 0.0
        %484 = vmatpush1.msra.mxu0 0.0
        %485 = vmatprep.subr.mxu0 0.0
        %486 = vmatpush1.msra.mxu0 0.0
        %487 = vmatprep.subr.mxu0 0.0
        %488 = vmatpush1.msra.mxu0 0.0
        %489 = vmatprep.subr.mxu0 0.0
        %490 = vmatpush1.msra.mxu0 0.0
        %491 = vmatprep.subr.mxu0 0.0
        %492 = vmatpush1.msra.mxu0 0.0
        %493 = vmatprep.subr.mxu0 0.0
        %494 = vmatpush1.msra.mxu0 0.0
        %495 = vmatprep.subr.mxu0 0.0
        %496 = vmatpush1.msra.mxu0 0.0
        %497 = vmatprep.subr.mxu0 0.0
        %498 = vmatpush1.msra.mxu0 0.0
        %499 = vmatprep.subr.mxu0 0.0
        %500 = vmatpush1.msra.mxu0 0.0
        %501 = vmatprep.subr.mxu0 0.0
        %502 = vmatpush1.msra.mxu0 0.0
        %503 = vmatprep.subr.mxu0 0.0
        %504 = vmatpush1.msra.mxu0 0.0
        %505 = vmatprep.subr.mxu0 0.0
        %506 = vmatpush1.msra.mxu0 0.0
        %507 = vmatprep.subr.mxu0 0.0
        %508 = vmatpush1.msra.mxu0 0.0
        %509 = vmatprep.subr.mxu0 0.0
        %510 = vmatpush1.msra.mxu0 0.0
        %511 = vmatprep.subr.mxu0 0.0
        %512 = vmatpush1.msra.mxu0 0.0
        %513 = vmatprep.mubr.f32.mxu0 0.0
        %514 = vmatmul.mubr.f32.gmra.mrb[0].mxu0 %v417
        %v515 = vpop.f32.mrb[0].mxu0
        %v516 = vadd.f32 0.0, %v515
        %v517 = vpop.f32.mrb[0].mxu0
        %518 = vmatprep.mubr.f32.mxu0 0.0
        %519 = vmatmul.mubr.f32.gmra.mrb[0].mxu0 %v418
        %v520 = vpop.f32.mrb[0].mxu0
        %v521 = vadd.f32 0.0, %v520
        %v522 = vpop.f32.mrb[0].mxu0
        %523 = vmatprep.mubr.f32.mxu0 0.0
        %524 = vmatmul.mubr.f32.gmra.mrb[0].mxu0 %v419
        %v525 = vpop.f32.mrb[0].mxu0
        %v526 = vadd.f32 0.0, %v525
        %v527 = vpop.f32.mrb[0].mxu0
        %528 = vmatprep.mubr.f32.mxu0 0.0
        %529 = vmatmul.mubr.f32.gmra.mrb[0].mxu0 %v420
        %v530 = vpop.f32.mrb[0].mxu0
        %v531 = vadd.f32 0.0, %v530
        %v532 = vpop.f32.mrb[0].mxu0
        %533 = vmatprep.mubr.f32.mxu0 0.0
        %534 = vmatmul.mubr.f32.gmra.mrb[0].mxu0 %v421
        %v535 = vpop.f32.mrb[0].mxu0
        %v536 = vadd.f32 0.0, %v535
        %v537 = vpop.f32.mrb[0].mxu0
        %538 = vmatprep.mubr.f32.mxu0 0.0
        %539 = vmatmul.mubr.f32.gmra.mrb[0].mxu0 %v422
        %v540 = vpop.f32.mrb[0].mxu0
        %v541 = vadd.f32 0.0, %v540
        %v542 = vpop.f32.mrb[0].mxu0
        %543 = vmatprep.mubr.f32.mxu0 0.0
        %544 = vmatmul.mubr.f32.gmra.mrb[0].mxu0 %v423
        %v545 = vpop.f32.mrb[0].mxu0
        %v546 = vadd.f32 0.0, %v545
        %v547 = vpop.f32.mrb[0].mxu0
        %548 = vmatprep.mubr.f32.mxu0 0.0
        %549 = vmatmul.mubr.f32.gmra.mrb[0].mxu0 %v424
        %v550 = vpop.f32.mrb[0].mxu0
        %v551 = vadd.f32 0.0, %v550
        %v552 = vpop.f32.mrb[0].mxu0
        %553 = vmatprep.mubr.f32.mxu0 0.0
        %554 = vmatmul.mubr.f32.gmra.mrb[0].mxu0 %v425
        %v555 = vpop.f32.mrb[0].mxu0
        %v556 = vadd.f32 0.0, %v555
        %v557 = vpop.f32.mrb[0].mxu0
        %558 = vmatprep.mubr.f32.mxu0 0.0
        %559 = vmatmul.mubr.f32.gmra.mrb[0].mxu0 %v426
        %v560 = vpop.f32.mrb[0].mxu0
        %v561 = vadd.f32 0.0, %v560
        %v562 = vpop.f32.mrb[0].mxu0
        %563 = vmatprep.mubr.f32.mxu0 0.0
        %564 = vmatmul.mubr.f32.gmra.mrb[0].mxu0 %v427
        %v565 = vpop.f32.mrb[0].mxu0
        %v566 = vadd.f32 0.0, %v565
        %v567 = vpop.f32.mrb[0].mxu0
        %568 = vmatprep.mubr.f32.mxu0 0.0
        %569 = vmatmul.mubr.f32.gmra.mrb[0].mxu0 %v428
        %v570 = vpop.f32.mrb[0].mxu0
        %v571 = vadd.f32 0.0, %v570
        %v572 = vpop.f32.mrb[0].mxu0
        %573 = vmatprep.mubr.f32.mxu0 0.0
        %574 = vmatmul.mubr.f32.gmra.mrb[0].mxu0 %v429
        %v575 = vpop.f32.mrb[0].mxu0
        %v576 = vadd.f32 0.0, %v575
        %v577 = vpop.f32.mrb[0].mxu0
        %578 = vmatprep.mubr.f32.mxu0 0.0
        %579 = vmatmul.mubr.f32.gmra.mrb[0].mxu0 %v430
        %v580 = vpop.f32.mrb[0].mxu0
        %v581 = vadd.f32 0.0, %v580
        %v582 = vpop.f32.mrb[0].mxu0
        %583 = vmatprep.mubr.f32.mxu0 0.0
        %584 = vmatmul.mubr.f32.gmra.mrb[0].mxu0 %v431
        %v585 = vpop.f32.mrb[0].mxu0
        %v586 = vadd.f32 0.0, %v585
        %v587 = vpop.f32.mrb[0].mxu0
        %588 = vmatprep.mubr.f32.mxu0 0.0
        %589 = vmatmul.mubr.f32.gmra.mrb[0].mxu0 %v432
        %v590 = vpop.f32.mrb[0].mxu0
        %v591 = vadd.f32 0.0, %v590
        %v592 = vpop.f32.mrb[0].mxu0
        %593 = vdwg.mxu0
        %v594 = vadd.f32 %v381, %v516
        %v595 = vadd.f32 %v382, %v521
        %v596 = vadd.f32 %v383, %v526
        %v597 = vadd.f32 %v384, %v531
        %v598 = vadd.f32 %v385, %v536
        %v599 = vadd.f32 %v386, %v541
        %v600 = vadd.f32 %v387, %v546
        %v601 = vadd.f32 %v388, %v551
        %v602 = vadd.f32 %v389, %v556
        %v603 = vadd.f32 %v390, %v561
        %v604 = vadd.f32 %v391, %v566
        %v605 = vadd.f32 %v392, %v571
        %v606 = vadd.f32 %v393, %v576
        %v607 = vadd.f32 %v394, %v581
        %v608 = vadd.f32 %v395, %v586
        %v609 = vadd.f32 %v396, %v591
        %610 = vst [vmem:[#allocation2] sm:$0xff] %v594
        %611 = vst [vmem:[#allocation2 + $0x8] sm:$0xff] %v595
        %612 = vst [vmem:[#allocation2 + $0x10] sm:$0xff] %v596
        %613 = vst [vmem:[#allocation2 + $0x18] sm:$0xff] %v597
        %614 = vst [vmem:[#allocation2 + $0x20] sm:$0xff] %v598
        %615 = vst [vmem:[#allocation2 + $0x28] sm:$0xff] %v599
        %616 = vst [vmem:[#allocation2 + $0x30] sm:$0xff] %v600
        %617 = vst [vmem:[#allocation2 + $0x38] sm:$0xff] %v601
        %618 = vst [vmem:[#allocation2 + $0x40] sm:$0xff] %v602
        %619 = vst [vmem:[#allocation2 + $0x48] sm:$0xff] %v603
        %620 = vst [vmem:[#allocation2 + $0x50] sm:$0xff] %v604
        %621 = vst [vmem:[#allocation2 + $0x58] sm:$0xff] %v605
        %622 = vst [vmem:[#allocation2 + $0x60] sm:$0xff] %v606
        %623 = vst [vmem:[#allocation2 + $0x68] sm:$0xff] %v607
        %624 = vst [vmem:[#allocation2 + $0x70] sm:$0xff] %v608
        %625 = vst [vmem:[#allocation2 + $0x78] sm:$0xff] %v609
        %p626 = scmp.eq.s32.totalorder %s22, 1
        // Predicated region
        $region87: #{gcl_forward.2} parent=77 // pred_check
          %p627 = pneg %p626
        $region88: #{gcl_forward.2} parent=77 // pred_check_branch
          %629 = sbr.rel (%p627) target = $region90
        $region89: #{gcl_forward.2} parent=77 // pred_region
          %v630 = vld [vmem:[%s353] sm:$0xff]
          %v631 = vld [vmem:[%s353 + $0x8] sm:$0xff]
          %v632 = vld [vmem:[%s353 + $0x10] sm:$0xff]
          %v633 = vld [vmem:[%s353 + $0x18] sm:$0xff]
          %v634 = vld [vmem:[%s353 + $0x20] sm:$0xff]
          %v635 = vld [vmem:[%s353 + $0x28] sm:$0xff]
          %v636 = vld [vmem:[%s353 + $0x30] sm:$0xff]
          %v637 = vld [vmem:[%s353 + $0x38] sm:$0xff]
          %v638 = vld [vmem:[%s353 + $0x40] sm:$0xff]
          %v639 = vld [vmem:[%s353 + $0x48] sm:$0xff]
          %v640 = vld [vmem:[%s353 + $0x50] sm:$0xff]
          %v641 = vld [vmem:[%s353 + $0x58] sm:$0xff]
          %v642 = vld [vmem:[%s353 + $0x60] sm:$0xff]
          %v643 = vld [vmem:[%s353 + $0x68] sm:$0xff]
          %v644 = vld [vmem:[%s353 + $0x70] sm:$0xff]
          %v645 = vld [vmem:[%s353 + $0x78] sm:$0xff]
          %v646 = vld [vmem:[#allocation2] sm:$0xff]
          %v647 = vld [vmem:[#allocation2 + $0x8] sm:$0xff]
          %v648 = vld [vmem:[#allocation2 + $0x10] sm:$0xff]
          %v649 = vld [vmem:[#allocation2 + $0x18] sm:$0xff]
          %v650 = vld [vmem:[#allocation2 + $0x20] sm:$0xff]
          %v651 = vld [vmem:[#allocation2 + $0x28] sm:$0xff]
          %v652 = vld [vmem:[#allocation2 + $0x30] sm:$0xff]
          %v653 = vld [vmem:[#allocation2 + $0x38] sm:$0xff]
          %v654 = vld [vmem:[#allocation2 + $0x40] sm:$0xff]
          %v655 = vld [vmem:[#allocation2 + $0x48] sm:$0xff]
          %v656 = vld [vmem:[#allocation2 + $0x50] sm:$0xff]
          %v657 = vld [vmem:[#allocation2 + $0x58] sm:$0xff]
          %v658 = vld [vmem:[#allocation2 + $0x60] sm:$0xff]
          %v659 = vld [vmem:[#allocation2 + $0x68] sm:$0xff]
          %v660 = vld [vmem:[#allocation2 + $0x70] sm:$0xff]
          %v661 = vld [vmem:[#allocation2 + $0x78] sm:$0xff]
          %v662 = vld [vmem:[%s3] sm:$0xff]
          %v663 = vld [vmem:[%s3 + $0x8] sm:$0xff]
          %v664 = vld [vmem:[%s3 + $0x10] sm:$0xff]
          %v665 = vld [vmem:[%s3 + $0x18] sm:$0xff]
          %v666 = vld [vmem:[%s3 + $0x20] sm:$0xff]
          %v667 = vld [vmem:[%s3 + $0x28] sm:$0xff]
          %v668 = vld [vmem:[%s3 + $0x30] sm:$0xff]
          %v669 = vld [vmem:[%s3 + $0x38] sm:$0xff]
          %v670 = vld [vmem:[%s3 + $0x40] sm:$0xff]
          %v671 = vld [vmem:[%s3 + $0x48] sm:$0xff]
          %v672 = vld [vmem:[%s3 + $0x50] sm:$0xff]
          %v673 = vld [vmem:[%s3 + $0x58] sm:$0xff]
          %v674 = vld [vmem:[%s3 + $0x60] sm:$0xff]
          %v675 = vld [vmem:[%s3 + $0x68] sm:$0xff]
          %v676 = vld [vmem:[%s3 + $0x70] sm:$0xff]
          %v677 = vld [vmem:[%s3 + $0x78] sm:$0xff]
          %678 = vmatprep.subr.mxu0 0.0
          %679 = vmatpush1.msra.mxu0 %v662
          %680 = vmatprep.subr.mxu0 0.0
          %681 = vmatpush1.msra.mxu0 %v663
          %682 = vmatprep.subr.mxu0 0.0
          %683 = vmatpush1.msra.mxu0 %v664
          %684 = vmatprep.subr.mxu0 0.0
          %685 = vmatpush1.msra.mxu0 %v665
          %686 = vmatprep.subr.mxu0 0.0
          %687 = vmatpush1.msra.mxu0 %v666
          %688 = vmatprep.subr.mxu0 0.0
          %689 = vmatpush1.msra.mxu0 %v667
          %690 = vmatprep.subr.mxu0 0.0
          %691 = vmatpush1.msra.mxu0 %v668
          %692 = vmatprep.subr.mxu0 0.0
          %693 = vmatpush1.msra.mxu0 %v669
          %694 = vmatprep.subr.mxu0 0.0
          %695 = vmatpush1.msra.mxu0 %v670
          %696 = vmatprep.subr.mxu0 0.0
          %697 = vmatpush1.msra.mxu0 %v671
          %698 = vmatprep.subr.mxu0 0.0
          %699 = vmatpush1.msra.mxu0 %v672
          %700 = vmatprep.subr.mxu0 0.0
          %701 = vmatpush1.msra.mxu0 %v673
          %702 = vmatprep.subr.mxu0 0.0
          %703 = vmatpush1.msra.mxu0 %v674
          %704 = vmatprep.subr.mxu0 0.0
          %705 = vmatpush1.msra.mxu0 %v675
          %706 = vmatprep.subr.mxu0 0.0
          %707 = vmatpush1.msra.mxu0 %v676
          %708 = vmatprep.subr.mxu0 0.0
          %709 = vmatpush1.msra.mxu0 %v677
          %710 = vmatprep.subr.mxu0 0.0
          %711 = vmatpush1.msra.mxu0 0.0
          %712 = vmatprep.subr.mxu0 0.0
          %713 = vmatpush1.msra.mxu0 0.0
          %714 = vmatprep.subr.mxu0 0.0
          %715 = vmatpush1.msra.mxu0 0.0
          %716 = vmatprep.subr.mxu0 0.0
          %717 = vmatpush1.msra.mxu0 0.0
          %718 = vmatprep.subr.mxu0 0.0
          %719 = vmatpush1.msra.mxu0 0.0
          %720 = vmatprep.subr.mxu0 0.0
          %721 = vmatpush1.msra.mxu0 0.0
          %722 = vmatprep.subr.mxu0 0.0
          %723 = vmatpush1.msra.mxu0 0.0
          %724 = vmatprep.subr.mxu0 0.0
          %725 = vmatpush1.msra.mxu0 0.0
          %726 = vmatprep.subr.mxu0 0.0
          %727 = vmatpush1.msra.mxu0 0.0
          %728 = vmatprep.subr.mxu0 0.0
          %729 = vmatpush1.msra.mxu0 0.0
          %730 = vmatprep.subr.mxu0 0.0
          %731 = vmatpush1.msra.mxu0 0.0
          %732 = vmatprep.subr.mxu0 0.0
          %733 = vmatpush1.msra.mxu0 0.0
          %734 = vmatprep.subr.mxu0 0.0
          %735 = vmatpush1.msra.mxu0 0.0
          %736 = vmatprep.subr.mxu0 0.0
          %737 = vmatpush1.msra.mxu0 0.0
          %738 = vmatprep.subr.mxu0 0.0
          %739 = vmatpush1.msra.mxu0 0.0
          %740 = vmatprep.subr.mxu0 0.0
          %741 = vmatpush1.msra.mxu0 0.0
          %742 = vmatprep.mubr.f32.mxu0 0.0
          %743 = vmatmul.mubr.f32.gmra.mrb[0].mxu0 %v646
          %v744 = vpop.f32.mrb[0].mxu0
          %v745 = vadd.f32 0.0, %v744
          %v746 = vpop.f32.mrb[0].mxu0
          %747 = vmatprep.mubr.f32.mxu0 0.0
          %748 = vmatmul.mubr.f32.gmra.mrb[0].mxu0 %v647
          %v749 = vpop.f32.mrb[0].mxu0
          %v750 = vadd.f32 0.0, %v749
          %v751 = vpop.f32.mrb[0].mxu0
          %752 = vmatprep.mubr.f32.mxu0 0.0
          %753 = vmatmul.mubr.f32.gmra.mrb[0].mxu0 %v648
          %v754 = vpop.f32.mrb[0].mxu0
          %v755 = vadd.f32 0.0, %v754
          %v756 = vpop.f32.mrb[0].mxu0
          %757 = vmatprep.mubr.f32.mxu0 0.0
          %758 = vmatmul.mubr.f32.gmra.mrb[0].mxu0 %v649
          %v759 = vpop.f32.mrb[0].mxu0
          %v760 = vadd.f32 0.0, %v759
          %v761 = vpop.f32.mrb[0].mxu0
          %762 = vmatprep.mubr.f32.mxu0 0.0
          %763 = vmatmul.mubr.f32.gmra.mrb[0].mxu0 %v650
          %v764 = vpop.f32.mrb[0].mxu0
          %v765 = vadd.f32 0.0, %v764
          %v766 = vpop.f32.mrb[0].mxu0
          %767 = vmatprep.mubr.f32.mxu0 0.0
          %768 = vmatmul.mubr.f32.gmra.mrb[0].mxu0 %v651
          %v769 = vpop.f32.mrb[0].mxu0
          %v770 = vadd.f32 0.0, %v769
          %v771 = vpop.f32.mrb[0].mxu0
          %772 = vmatprep.mubr.f32.mxu0 0.0
          %773 = vmatmul.mubr.f32.gmra.mrb[0].mxu0 %v652
          %v774 = vpop.f32.mrb[0].mxu0
          %v775 = vadd.f32 0.0, %v774
          %v776 = vpop.f32.mrb[0].mxu0
          %777 = vmatprep.mubr.f32.mxu0 0.0
          %778 = vmatmul.mubr.f32.gmra.mrb[0].mxu0 %v653
          %v779 = vpop.f32.mrb[0].mxu0
          %v780 = vadd.f32 0.0, %v779
          %v781 = vpop.f32.mrb[0].mxu0
          %782 = vmatprep.mubr.f32.mxu0 0.0
          %783 = vmatmul.mubr.f32.gmra.mrb[0].mxu0 %v654
          %v784 = vpop.f32.mrb[0].mxu0
          %v785 = vadd.f32 0.0, %v784
          %v786 = vpop.f32.mrb[0].mxu0
          %787 = vmatprep.mubr.f32.mxu0 0.0
          %788 = vmatmul.mubr.f32.gmra.mrb[0].mxu0 %v655
          %v789 = vpop.f32.mrb[0].mxu0
          %v790 = vadd.f32 0.0, %v789
          %v791 = vpop.f32.mrb[0].mxu0
          %792 = vmatprep.mubr.f32.mxu0 0.0
          %793 = vmatmul.mubr.f32.gmra.mrb[0].mxu0 %v656
          %v794 = vpop.f32.mrb[0].mxu0
          %v795 = vadd.f32 0.0, %v794
          %v796 = vpop.f32.mrb[0].mxu0
          %797 = vmatprep.mubr.f32.mxu0 0.0
          %798 = vmatmul.mubr.f32.gmra.mrb[0].mxu0 %v657
          %v799 = vpop.f32.mrb[0].mxu0
          %v800 = vadd.f32 0.0, %v799
          %v801 = vpop.f32.mrb[0].mxu0
          %802 = vmatprep.mubr.f32.mxu0 0.0
          %803 = vmatmul.mubr.f32.gmra.mrb[0].mxu0 %v658
          %v804 = vpop.f32.mrb[0].mxu0
          %v805 = vadd.f32 0.0, %v804
          %v806 = vpop.f32.mrb[0].mxu0
          %807 = vmatprep.mubr.f32.mxu0 0.0
          %808 = vmatmul.mubr.f32.gmra.mrb[0].mxu0 %v659
          %v809 = vpop.f32.mrb[0].mxu0
          %v810 = vadd.f32 0.0, %v809
          %v811 = vpop.f32.mrb[0].mxu0
          %812 = vmatprep.mubr.f32.mxu0 0.0
          %813 = vmatmul.mubr.f32.gmra.mrb[0].mxu0 %v660
          %v814 = vpop.f32.mrb[0].mxu0
          %v815 = vadd.f32 0.0, %v814
          %v816 = vpop.f32.mrb[0].mxu0
          %817 = vmatprep.mubr.f32.mxu0 0.0
          %818 = vmatmul.mubr.f32.gmra.mrb[0].mxu0 %v661
          %v819 = vpop.f32.mrb[0].mxu0
          %v820 = vadd.f32 0.0, %v819
          %v821 = vpop.f32.mrb[0].mxu0
          %822 = vdwg.mxu0
          %824 = vset.pattern.permute.xlu0 0
          %825 = vperm.xlu0 %824, %v630
          %v826 = vpop.permute.xlu0 %825
          %829 = vset.pattern.permute.xlu0 0
          %830 = vperm.xlu0 %829, %v631
          %v831 = vpop.permute.xlu0 %830
          %834 = vset.pattern.permute.xlu0 0
          %835 = vperm.xlu0 %834, %v632
          %v836 = vpop.permute.xlu0 %835
          %839 = vset.pattern.permute.xlu0 0
          %840 = vperm.xlu0 %839, %v633
          %v841 = vpop.permute.xlu0 %840
          %844 = vset.pattern.permute.xlu0 0
          %845 = vperm.xlu0 %844, %v634
          %v846 = vpop.permute.xlu0 %845
          %849 = vset.pattern.permute.xlu0 0
          %850 = vperm.xlu0 %849, %v635
          %v851 = vpop.permute.xlu0 %850
          %854 = vset.pattern.permute.xlu0 0
          %855 = vperm.xlu0 %854, %v636
          %v856 = vpop.permute.xlu0 %855
          %859 = vset.pattern.permute.xlu0 0
          %860 = vperm.xlu0 %859, %v637
          %v861 = vpop.permute.xlu0 %860
          %864 = vset.pattern.permute.xlu0 0
          %865 = vperm.xlu0 %864, %v638
          %v866 = vpop.permute.xlu0 %865
          %869 = vset.pattern.permute.xlu0 0
          %870 = vperm.xlu0 %869, %v639
          %v871 = vpop.permute.xlu0 %870
          %874 = vset.pattern.permute.xlu0 0
          %875 = vperm.xlu0 %874, %v640
          %v876 = vpop.permute.xlu0 %875
          %879 = vset.pattern.permute.xlu0 0
          %880 = vperm.xlu0 %879, %v641
          %v881 = vpop.permute.xlu0 %880
          %884 = vset.pattern.permute.xlu0 0
          %885 = vperm.xlu0 %884, %v642
          %v886 = vpop.permute.xlu0 %885
          %889 = vset.pattern.permute.xlu0 0
          %890 = vperm.xlu0 %889, %v643
          %v891 = vpop.permute.xlu0 %890
          %894 = vset.pattern.permute.xlu0 0
          %895 = vperm.xlu0 %894, %v644
          %v896 = vpop.permute.xlu0 %895
          %899 = vset.pattern.permute.xlu0 0
          %900 = vperm.xlu0 %899, %v645
          %v901 = vpop.permute.xlu0 %900
          %v903 = vmul.f32 %v826, %v745
          %v904 = vmul.f32 %v831, %v750
          %v905 = vmul.f32 %v836, %v755
          %v906 = vmul.f32 %v841, %v760
          %v907 = vmul.f32 %v846, %v765
          %v908 = vmul.f32 %v851, %v770
          %v909 = vmul.f32 %v856, %v775
          %v910 = vmul.f32 %v861, %v780
          %v911 = vmul.f32 %v866, %v785
          %v912 = vmul.f32 %v871, %v790
          %v913 = vmul.f32 %v876, %v795
          %v914 = vmul.f32 %v881, %v800
          %v915 = vmul.f32 %v886, %v805
          %v916 = vmul.f32 %v891, %v810
          %v917 = vmul.f32 %v896, %v815
          %v918 = vmul.f32 %v901, %v820
          %v919 = vld [vmem:[%s4] sm:$0x1]
          %v921 = vlaneseq
          %v922 = vshrl.u32 %v921, 7
          %v923 = vsub.s32 0, %v922
          %v924 = vrot.slane %v919, %v923
          %v926 = vadd.f32 %v903, %v924
          %v927 = vadd.f32 %v904, %v924
          %v928 = vadd.f32 %v905, %v924
          %v929 = vadd.f32 %v906, %v924
          %v930 = vadd.f32 %v907, %v924
          %v931 = vadd.f32 %v908, %v924
          %v932 = vadd.f32 %v909, %v924
          %v933 = vadd.f32 %v910, %v924
          %v934 = vadd.f32 %v911, %v924
          %v935 = vadd.f32 %v912, %v924
          %v936 = vadd.f32 %v913, %v924
          %v937 = vadd.f32 %v914, %v924
          %v938 = vadd.f32 %v915, %v924
          %v939 = vadd.f32 %v916, %v924
          %v940 = vadd.f32 %v917, %v924
          %v941 = vadd.f32 %v918, %v924
          %v942 = vmax.f32 %v926, 0.0
          %v943 = vmax.f32 %v927, 0.0
          %v944 = vmax.f32 %v928, 0.0
          %v945 = vmax.f32 %v929, 0.0
          %v946 = vmax.f32 %v930, 0.0
          %v947 = vmax.f32 %v931, 0.0
          %v948 = vmax.f32 %v932, 0.0
          %v949 = vmax.f32 %v933, 0.0
          %v950 = vmax.f32 %v934, 0.0
          %v951 = vmax.f32 %v935, 0.0
          %v952 = vmax.f32 %v936, 0.0
          %v953 = vmax.f32 %v937, 0.0
          %v954 = vmax.f32 %v938, 0.0
          %v955 = vmax.f32 %v939, 0.0
          %v956 = vmax.f32 %v940, 0.0
          %v957 = vmax.f32 %v941, 0.0
          %v958 = vld [vmem:[%s5] sm:$0xff]
          %v959 = vld [vmem:[%s5 + $0x8] sm:$0xff]
          %v960 = vld [vmem:[%s5 + $0x10] sm:$0xff]
          %v961 = vld [vmem:[%s5 + $0x18] sm:$0xff]
          %v962 = vld [vmem:[%s5 + $0x20] sm:$0xff]
          %v963 = vld [vmem:[%s5 + $0x28] sm:$0xff]
          %v964 = vld [vmem:[%s5 + $0x30] sm:$0xff]
          %v965 = vld [vmem:[%s5 + $0x38] sm:$0xff]
          %v966 = vld [vmem:[%s5 + $0x40] sm:$0xff]
          %v967 = vld [vmem:[%s5 + $0x48] sm:$0xff]
          %v968 = vld [vmem:[%s5 + $0x50] sm:$0xff]
          %v969 = vld [vmem:[%s5 + $0x58] sm:$0xff]
          %v970 = vld [vmem:[%s5 + $0x60] sm:$0xff]
          %v971 = vld [vmem:[%s5 + $0x68] sm:$0xff]
          %v972 = vld [vmem:[%s5 + $0x70] sm:$0xff]
          %v973 = vld [vmem:[%s5 + $0x78] sm:$0xff]
          %974 = vmatprep.subr.mxu0 0.0
          %975 = vmatpush1.msra.mxu0 %v958
          %976 = vmatprep.subr.mxu0 0.0
          %977 = vmatpush1.msra.mxu0 %v959
          %978 = vmatprep.subr.mxu0 0.0
          %979 = vmatpush1.msra.mxu0 %v960
          %980 = vmatprep.subr.mxu0 0.0
          %981 = vmatpush1.msra.mxu0 %v961
          %982 = vmatprep.subr.mxu0 0.0
          %983 = vmatpush1.msra.mxu0 %v962
          %984 = vmatprep.subr.mxu0 0.0
          %985 = vmatpush1.msra.mxu0 %v963
          %986 = vmatprep.subr.mxu0 0.0
          %987 = vmatpush1.msra.mxu0 %v964
          %988 = vmatprep.subr.mxu0 0.0
          %989 = vmatpush1.msra.mxu0 %v965
          %990 = vmatprep.subr.mxu0 0.0
          %991 = vmatpush1.msra.mxu0 %v966
          %992 = vmatprep.subr.mxu0 0.0
          %993 = vmatpush1.msra.mxu0 %v967
          %994 = vmatprep.subr.mxu0 0.0
          %995 = vmatpush1.msra.mxu0 %v968
          %996 = vmatprep.subr.mxu0 0.0
          %997 = vmatpush1.msra.mxu0 %v969
          %998 = vmatprep.subr.mxu0 0.0
          %999 = vmatpush1.msra.mxu0 %v970
          %1000 = vmatprep.subr.mxu0 0.0
          %1001 = vmatpush1.msra.mxu0 %v971
          %1002 = vmatprep.subr.mxu0 0.0
          %1003 = vmatpush1.msra.mxu0 %v972
          %1004 = vmatprep.subr.mxu0 0.0
          %1005 = vmatpush1.msra.mxu0 %v973
          %1006 = vmatprep.subr.mxu0 0.0
          %1007 = vmatpush1.msra.mxu0 0.0
          %1008 = vmatprep.subr.mxu0 0.0
          %1009 = vmatpush1.msra.mxu0 0.0
          %1010 = vmatprep.subr.mxu0 0.0
          %1011 = vmatpush1.msra.mxu0 0.0
          %1012 = vmatprep.subr.mxu0 0.0
          %1013 = vmatpush1.msra.mxu0 0.0
          %1014 = vmatprep.subr.mxu0 0.0
          %1015 = vmatpush1.msra.mxu0 0.0
          %1016 = vmatprep.subr.mxu0 0.0
          %1017 = vmatpush1.msra.mxu0 0.0
          %1018 = vmatprep.subr.mxu0 0.0
          %1019 = vmatpush1.msra.mxu0 0.0
          %1020 = vmatprep.subr.mxu0 0.0
          %1021 = vmatpush1.msra.mxu0 0.0
          %1022 = vmatprep.subr.mxu0 0.0
          %1023 = vmatpush1.msra.mxu0 0.0
          %1024 = vmatprep.subr.mxu0 0.0
          %1025 = vmatpush1.msra.mxu0 0.0
          %1026 = vmatprep.subr.mxu0 0.0
          %1027 = vmatpush1.msra.mxu0 0.0
          %1028 = vmatprep.subr.mxu0 0.0
          %1029 = vmatpush1.msra.mxu0 0.0
          %1030 = vmatprep.subr.mxu0 0.0
          %1031 = vmatpush1.msra.mxu0 0.0
          %1032 = vmatprep.subr.mxu0 0.0
          %1033 = vmatpush1.msra.mxu0 0.0
          %1034 = vmatprep.subr.mxu0 0.0
          %1035 = vmatpush1.msra.mxu0 0.0
          %1036 = vmatprep.subr.mxu0 0.0
          %1037 = vmatpush1.msra.mxu0 0.0
          %1038 = vmatprep.mubr.f32.mxu0 0.0
          %1039 = vmatmul.mubr.f32.gmra.mrb[0].mxu0 %v942
          %v1040 = vpop.f32.mrb[0].mxu0
          %v1041 = vadd.f32 0.0, %v1040
          %v1042 = vpop.f32.mrb[0].mxu0
          %1043 = vmatprep.mubr.f32.mxu0 0.0
          %1044 = vmatmul.mubr.f32.gmra.mrb[0].mxu0 %v943
          %v1045 = vpop.f32.mrb[0].mxu0
          %v1046 = vadd.f32 0.0, %v1045
          %v1047 = vpop.f32.mrb[0].mxu0
          %1048 = vmatprep.mubr.f32.mxu0 0.0
          %1049 = vmatmul.mubr.f32.gmra.mrb[0].mxu0 %v944
          %v1050 = vpop.f32.mrb[0].mxu0
          %v1051 = vadd.f32 0.0, %v1050
          %v1052 = vpop.f32.mrb[0].mxu0
          %1053 = vmatprep.mubr.f32.mxu0 0.0
          %1054 = vmatmul.mubr.f32.gmra.mrb[0].mxu0 %v945
          %v1055 = vpop.f32.mrb[0].mxu0
          %v1056 = vadd.f32 0.0, %v1055
          %v1057 = vpop.f32.mrb[0].mxu0
          %1058 = vmatprep.mubr.f32.mxu0 0.0
          %1059 = vmatmul.mubr.f32.gmra.mrb[0].mxu0 %v946
          %v1060 = vpop.f32.mrb[0].mxu0
          %v1061 = vadd.f32 0.0, %v1060
          %v1062 = vpop.f32.mrb[0].mxu0
          %1063 = vmatprep.mubr.f32.mxu0 0.0
          %1064 = vmatmul.mubr.f32.gmra.mrb[0].mxu0 %v947
          %v1065 = vpop.f32.mrb[0].mxu0
          %v1066 = vadd.f32 0.0, %v1065
          %v1067 = vpop.f32.mrb[0].mxu0
          %1068 = vmatprep.mubr.f32.mxu0 0.0
          %1069 = vmatmul.mubr.f32.gmra.mrb[0].mxu0 %v948
          %v1070 = vpop.f32.mrb[0].mxu0
          %v1071 = vadd.f32 0.0, %v1070
          %v1072 = vpop.f32.mrb[0].mxu0
          %1073 = vmatprep.mubr.f32.mxu0 0.0
          %1074 = vmatmul.mubr.f32.gmra.mrb[0].mxu0 %v949
          %v1075 = vpop.f32.mrb[0].mxu0
          %v1076 = vadd.f32 0.0, %v1075
          %v1077 = vpop.f32.mrb[0].mxu0
          %1078 = vmatprep.mubr.f32.mxu0 0.0
          %1079 = vmatmul.mubr.f32.gmra.mrb[0].mxu0 %v950
          %v1080 = vpop.f32.mrb[0].mxu0
          %v1081 = vadd.f32 0.0, %v1080
          %v1082 = vpop.f32.mrb[0].mxu0
          %1083 = vmatprep.mubr.f32.mxu0 0.0
          %1084 = vmatmul.mubr.f32.gmra.mrb[0].mxu0 %v951
          %v1085 = vpop.f32.mrb[0].mxu0
          %v1086 = vadd.f32 0.0, %v1085
          %v1087 = vpop.f32.mrb[0].mxu0
          %1088 = vmatprep.mubr.f32.mxu0 0.0
          %1089 = vmatmul.mubr.f32.gmra.mrb[0].mxu0 %v952
          %v1090 = vpop.f32.mrb[0].mxu0
          %v1091 = vadd.f32 0.0, %v1090
          %v1092 = vpop.f32.mrb[0].mxu0
          %1093 = vmatprep.mubr.f32.mxu0 0.0
          %1094 = vmatmul.mubr.f32.gmra.mrb[0].mxu0 %v953
          %v1095 = vpop.f32.mrb[0].mxu0
          %v1096 = vadd.f32 0.0, %v1095
          %v1097 = vpop.f32.mrb[0].mxu0
          %1098 = vmatprep.mubr.f32.mxu0 0.0
          %1099 = vmatmul.mubr.f32.gmra.mrb[0].mxu0 %v954
          %v1100 = vpop.f32.mrb[0].mxu0
          %v1101 = vadd.f32 0.0, %v1100
          %v1102 = vpop.f32.mrb[0].mxu0
          %1103 = vmatprep.mubr.f32.mxu0 0.0
          %1104 = vmatmul.mubr.f32.gmra.mrb[0].mxu0 %v955
          %v1105 = vpop.f32.mrb[0].mxu0
          %v1106 = vadd.f32 0.0, %v1105
          %v1107 = vpop.f32.mrb[0].mxu0
          %1108 = vmatprep.mubr.f32.mxu0 0.0
          %1109 = vmatmul.mubr.f32.gmra.mrb[0].mxu0 %v956
          %v1110 = vpop.f32.mrb[0].mxu0
          %v1111 = vadd.f32 0.0, %v1110
          %v1112 = vpop.f32.mrb[0].mxu0
          %1113 = vmatprep.mubr.f32.mxu0 0.0
          %1114 = vmatmul.mubr.f32.gmra.mrb[0].mxu0 %v957
          %v1115 = vpop.f32.mrb[0].mxu0
          %v1116 = vadd.f32 0.0, %v1115
          %v1117 = vpop.f32.mrb[0].mxu0
          %1118 = vdwg.mxu0
          %v1119 = vmul.f32 %v826, %v1041
          %v1120 = vmul.f32 %v831, %v1046
          %v1121 = vmul.f32 %v836, %v1051
          %v1122 = vmul.f32 %v841, %v1056
          %v1123 = vmul.f32 %v846, %v1061
          %v1124 = vmul.f32 %v851, %v1066
          %v1125 = vmul.f32 %v856, %v1071
          %v1126 = vmul.f32 %v861, %v1076
          %v1127 = vmul.f32 %v866, %v1081
          %v1128 = vmul.f32 %v871, %v1086
          %v1129 = vmul.f32 %v876, %v1091
          %v1130 = vmul.f32 %v881, %v1096
          %v1131 = vmul.f32 %v886, %v1101
          %v1132 = vmul.f32 %v891, %v1106
          %v1133 = vmul.f32 %v896, %v1111
          %v1134 = vmul.f32 %v901, %v1116
          %1135 = vst [vmem:[%s359] sm:$0xff] %v1119
          %1136 = vst [vmem:[%s359 + $0x8] sm:$0xff] %v1120
          %1137 = vst [vmem:[%s359 + $0x10] sm:$0xff] %v1121
          %1138 = vst [vmem:[%s359 + $0x18] sm:$0xff] %v1122
          %1139 = vst [vmem:[%s359 + $0x20] sm:$0xff] %v1123
          %1140 = vst [vmem:[%s359 + $0x28] sm:$0xff] %v1124
          %1141 = vst [vmem:[%s359 + $0x30] sm:$0xff] %v1125
          %1142 = vst [vmem:[%s359 + $0x38] sm:$0xff] %v1126
          %1143 = vst [vmem:[%s359 + $0x40] sm:$0xff] %v1127
          %1144 = vst [vmem:[%s359 + $0x48] sm:$0xff] %v1128
          %1145 = vst [vmem:[%s359 + $0x50] sm:$0xff] %v1129
          %1146 = vst [vmem:[%s359 + $0x58] sm:$0xff] %v1130
          %1147 = vst [vmem:[%s359 + $0x60] sm:$0xff] %v1131
          %1148 = vst [vmem:[%s359 + $0x68] sm:$0xff] %v1132
          %1149 = vst [vmem:[%s359 + $0x70] sm:$0xff] %v1133
          %1150 = vst [vmem:[%s359 + $0x78] sm:$0xff] %v1134
        $region90: #{gcl_forward.2} parent=77 // pred_fallthru
          _
        %s1151 = smul.u32 16, %s21
        %p1152 = scmp.lt.s32.totalorder %s1151, 31
        %s1153 = scalar_select %p1152, %s1151, 31
        %s1154 = smul.addr %s1153, 8
        %s1155 = scalar_lea.vmem %s6, %s1154
        // Predicated region
        $region91: #{gcl_forward.2} parent=77 // pred_check
          %p1156 = pneg %p190
        $region92: #{gcl_forward.2} parent=77 // pred_check_branch
          %1158 = sbr.rel (%p1156) target = $region94
        $region93: #{gcl_forward.2} parent=77 // pred_region
          %s1159 = smul.u32 16, %s21
        $region94: #{gcl_forward.2} parent=77 // pred_fallthru
          _
      $region78: #{gcl_forward.2} parent=5 // pred_fallthru
        _
      %p1160 = scmp.le.s32.totalorder 2, %s12
      // Predicated region
      $region95: #{gcl_forward.2} parent=5 // pred_check
        %p1161 = pneg %p1160
      $region96: #{gcl_forward.2} parent=5 // pred_check_branch
        %1163 = sbr.rel (%p1161) target = $region98
      $region97: #{gcl_forward.2} parent=5 // pred_region
        %s1164 = ssub.s32 %s12, 2
        // Predicated region
        $region99: #{gcl_forward.2} parent=97 // pred_check
          %p1165 = pneg %p196
        $region100: #{gcl_forward.2} parent=97 // pred_check_branch
          %1167 = sbr.rel (%p1165) target = $region102
        $region101: #{gcl_forward.2} parent=97 // pred_region
          %s1168 = smul.u32 16, %s23
          %p1169 = scmp.lt.s32.totalorder %s1168, 31
          %s1170 = scalar_select %p1169, %s1168, 31
          %s1171 = smul.addr %s1170, 8
          %s1172 = scalar_lea.vmem %s6, %s1171
        $region102: #{gcl_forward.2} parent=97 // pred_fallthru
          _
      $region98: #{gcl_forward.2} parent=5 // pred_fallthru
        _
    $region6: #{gcl_forward.2} parent=1 // loop_footer
      %s16 = sadd.s32 1, %s12
    $region7: #{gcl_forward.2} parent=1 // loop_footer_branch
      %11 = sbr.rel target = $region3
    $region8: #{gcl_forward.2} parent=1 // loop_exit
      _

</llo_original>
